<compile_context>
chip_gen: v6e
topology: v6e:2x2x1
jax: 0.10.0
libtpu: 0.0.40
codegen_flags: <defaults>
</compile_context>

<pallas_src>
import functools
import math

import jax
import jax.numpy as jnp
from jax import lax
from jax.experimental import pallas as pl
from jax.experimental.pallas import tpu as pltpu


# ----------------------------------------------------------------------------
# Helpers
# ----------------------------------------------------------------------------
def _pick_block(dim, preferred, align):
    """Largest block <= preferred that divides dim and respects `align`,
    falling back to the full dim (always legal for BlockSpec)."""
    if dim <= preferred:
        return dim
    cand = (preferred // align) * align
    while cand >= align:
        if dim % cand == 0:
            return cand
        cand -= align
    return dim


# ----------------------------------------------------------------------------
# Tiled matmul kernels (bf16 operands, f32 accumulation)
# ----------------------------------------------------------------------------
def _matmul_kernel(x_ref, w_ref, o_ref, acc_ref):
    @pl.when(pl.program_id(2) == 0)
    def _():
        acc_ref[...] = jnp.zeros_like(acc_ref)

    acc_ref[...] += jnp.dot(
        x_ref[...], w_ref[...], preferred_element_type=jnp.float32
    )

    @pl.when(pl.program_id(2) == pl.num_programs(2) - 1)
    def _():
        o_ref[...] = acc_ref[...].astype(o_ref.dtype)


def _matmul_bias_kernel(x_ref, w_ref, b_ref, o_ref, acc_ref):
    @pl.when(pl.program_id(2) == 0)
    def _():
        acc_ref[...] = jnp.zeros_like(acc_ref)

    acc_ref[...] += jnp.dot(
        x_ref[...], w_ref[...], preferred_element_type=jnp.float32
    )

    @pl.when(pl.program_id(2) == pl.num_programs(2) - 1)
    def _():
        o_ref[...] = (acc_ref[...] + b_ref[...]).astype(o_ref.dtype)


def pallas_matmul(x, w, bias=None, out_dtype=None, tm=256, tn=256, tk=512):
    M, K = x.shape
    K2, N = w.shape
    assert K == K2
    if out_dtype is None:
        out_dtype = x.dtype

    tm = _pick_block(M, tm, 8)
    tk = _pick_block(K, tk, 128)
    tn = _pick_block(N, tn, 128)
    grid = (M // tm, N // tn, K // tk)

    x_spec = pl.BlockSpec((tm, tk), lambda i, j, k: (i, k))
    w_spec = pl.BlockSpec((tk, tn), lambda i, j, k: (k, j))
    common = dict(
        out_shape=jax.ShapeDtypeStruct((M, N), out_dtype),
        grid=grid,
        out_specs=pl.BlockSpec((tm, tn), lambda i, j, k: (i, j)),
        scratch_shapes=[pltpu.VMEM((tm, tn), jnp.float32)],
        compiler_params=pltpu.CompilerParams(
            dimension_semantics=("parallel", "parallel", "arbitrary")
        ),
    )

    if bias is None:
        return pl.pallas_call(
            _matmul_kernel, in_specs=[x_spec, w_spec], **common
        )(x, w)

    b2 = bias.reshape(1, N).astype(jnp.float32)
    b_spec = pl.BlockSpec((1, tn), lambda i, j, k: (0, j))
    return pl.pallas_call(
        _matmul_bias_kernel, in_specs=[x_spec, w_spec, b_spec], **common
    )(x, w, b2)


# ----------------------------------------------------------------------------
# Masked multi-head attention kernel (per batch, all heads in-kernel)
# ----------------------------------------------------------------------------
def _attn_kernel(qkv_ref, mq_ref, mk_ref, o_ref, *,
                 num_heads, head_dim, scale, q_chunk):
    C = num_heads * head_dim
    N = qkv_ref.shape[1]

    slab = qkv_ref[0]                      # (N, 3C) bf16, one dense load
    mq = mq_ref[0]                         # (N, 1)  f32 row (query) mask
    mk = mk_ref[0]                         # (1, N)  f32 col (key) mask
    col_ok = mk > 0.0                      # (1, N)
    mask_value = jnp.float32(-jnp.finfo(jnp.float32).max)

    for q0 in range(0, N, q_chunk):
        q1 = q0 + q_chunk
        # (tq, N) validity predicate built in-kernel (no (B,N,N) HBM mask).
        valid = jnp.logical_and(mq[q0:q1] > 0.0, col_ok)

        for h in range(num_heads):
            off = h * head_dim
            q = slab[q0:q1, off:off + head_dim]                 # (tq, hd)
            k = slab[:, C + off:C + off + head_dim]             # (N,  hd)
            v = slab[:, 2 * C + off:2 * C + off + head_dim]     # (N,  hd)

            # fold 1/sqrt(hd) into q: tq*hd multiplies instead of tq*N
            qf = (q.astype(jnp.float32) * scale).astype(slab.dtype)

            # q @ k^T without an explicit transpose of k
            s = lax.dot_general(
                qf, k,
                dimension_numbers=(((1,), (1,)), ((), ())),
                preferred_element_type=jnp.float32,
            )                                                   # (tq, N) f32

            s = jnp.where(valid, s, mask_value)

            # numerically-stable softmax (f32), approx reciprocal on EUP
            s = s - jnp.max(s, axis=-1, keepdims=True)
            p = jnp.exp(s)
            p = p * pl.reciprocal(
                jnp.sum(p, axis=-1, keepdims=True), approx=True
            )

            out_h = jnp.dot(
                p.astype(slab.dtype), v, preferred_element_type=jnp.float32
            )                                                   # (tq, hd)

            # lane-dense (1, N, C) output block: per-head column slab write
            o_ref[0, q0:q1, off:off + head_dim] = out_h.astype(o_ref.dtype)


def pallas_masked_attention(qkv_bnc, mask, num_heads, head_dim, scale,
                            out_dtype):
    B, N, threeC = qkv_bnc.shape
    C = num_heads * head_dim
    assert threeC == 3 * C

    mask_f = mask.astype(jnp.float32)
    mq = mask_f[:, :, None]          # (B, N, 1)
    mk = mask_f[:, None, :]          # (B, 1, N)

    # Cap the live (tq, N) score buffer for long sequences (v7x VMEM budget).
    q_chunk = _pick_block(N, 512, 8)
    # TODO(synk): for very long N (>~8k) switch to flash-style KV tiling with
    # online softmax to also bound the N (key) extent of the score tile.

    kernel = functools.partial(
        _attn_kernel, num_heads=num_heads, head_dim=head_dim,
        scale=scale, q_chunk=q_chunk,
    )
    return pl.pallas_call(
        kernel,
        out_shape=jax.ShapeDtypeStruct((B, N, C), out_dtype),
        grid=(B,),
        in_specs=[
            pl.BlockSpec((1, N, threeC), lambda b: (b, 0, 0)),
            pl.BlockSpec((1, N, 1), lambda b: (b, 0, 0)),
            pl.BlockSpec((1, 1, N), lambda b: (b, 0, 0)),
        ],
        out_specs=pl.BlockSpec((1, N, C), lambda b: (b, 0, 0)),
        compiler_params=pltpu.CompilerParams(
            dimension_semantics=("parallel",)
        ),
    )(qkv_bnc, mq, mk)


# ----------------------------------------------------------------------------
# Module-level forward
# ----------------------------------------------------------------------------
def masked_attention_forward(params, x, mask, num_heads):
    B, N, C = x.shape
    H = num_heads
    hd = C // H
    scale = hd ** (-0.5)
    mxu_dtype = jnp.bfloat16

    # qkv projection (no bias): (B*N, C) @ (C, 3C), bf16 MXU / f32 accumulate.
    x2 = x.reshape(B * N, C).astype(mxu_dtype)
    w_qkv_t = params["w_qkv"].T.astype(mxu_dtype)      # (C, 3C)
    qkv = pallas_matmul(x2, w_qkv_t, out_dtype=mxu_dtype)       # (B*N, 3C)
    qkv = qkv.reshape(B, N, 3 * C)  # free reshape, no head transpose in HBM

    # attention: grid over batch, heads handled in-kernel, (B,N,C) output.
    out = pallas_masked_attention(qkv, mask, H, hd, scale,
                                  out_dtype=mxu_dtype)          # (B, N, C)
    # TODO(synk): attention/projection dropout omitted (eval-mode identity).

    # output projection with bias, f32 result.
    w_proj_t = params["w_proj"].T.astype(mxu_dtype)    # (C, C)
    y = pallas_matmul(out.reshape(B * N, C), w_proj_t,
                      bias=params["b_proj"], out_dtype=x.dtype)
    return y.reshape(B, N, C)


# ----------------------------------------------------------------------------
# Pure-JAX reference (f32 throughout) for verification
# ----------------------------------------------------------------------------
def masked_attention_reference(params, x, mask, num_heads):
    B, N, C = x.shape
    H = num_heads
    hd = C // H
    scale = hd ** (-0.5)

    qkv = x @ params["w_qkv"].T
    qkv = qkv.reshape(B, N, 3, H, hd).transpose(2, 0, 3, 1, 4)
    q, k, v = qkv[0], qkv[1], qkv[2]

    attn = jnp.einsum("bhqd,bhkd->bhqk", q, k) * scale
    mask2d = (mask[:, None, :] & mask[:, :, None])[:, None, :, :]  # (B,1,N,N)
    mask_value = -jnp.finfo(attn.dtype).max
    attn = jnp.where(mask2d, attn, mask_value)
    attn = jax.nn.softmax(attn, axis=-1)

    out = jnp.einsum("bhqk,bhkd->bhqd", attn, v)
    out = out.transpose(0, 2, 1, 3).reshape(B, N, C)
    return out @ params["w_proj"].T + params["b_proj"]


# ----------------------------------------------------------------------------
# Main
# ----------------------------------------------------------------------------
if __name__ == "__main__":
    B, N, C = 2, 8, 32
    num_heads = 8

    key = jax.random.PRNGKey(0)
    k_x, k_qkv, k_proj, k_bias, k_mask = jax.random.split(key, 5)

    # Deterministic parameter init (shapes match torch Linear: (out, in)).
    bound = 1.0 / math.sqrt(C)
    params = {
        "w_qkv": jax.random.uniform(k_qkv, (3 * C, C), jnp.float32, -bound, bound),
        "w_proj": jax.random.uniform(k_proj, (C, C), jnp.float32, -bound, bound),
        "b_proj": jax.random.uniform(k_bias, (C,), jnp.float32, -bound, bound),
    }

    x = jax.random.normal(k_x, (B, N, C), jnp.float32)
    # boolean token mask (True = keep); keep at least the first token per batch
    mask = jax.random.bernoulli(k_mask, 0.7, (B, N))
    mask = mask.at[:, 0].set(True)

    fwd = jax.jit(functools.partial(masked_attention_forward, num_heads=num_heads))
    y = fwd(params, x, mask)
    y = jax.block_until_ready(y)

    y_ref = masked_attention_reference(params, x, mask, num_heads)
    assert y.shape == (B, N, C)
    # bf16 MXU operands with f32 accumulation -> loosened tolerance vs f32 ref.
    assert jnp.allclose(y, y_ref, atol=5e-2, rtol=5e-2), "mismatch vs reference"

    print("KERNEL_OK")
</pallas_src>

<mosaic_0001>
module attributes {stable_mosaic.version = 11 : i64} {
  func.func @_matmul_kernel(%arg0: i32, %arg1: i32, %arg2: i32, %arg3: memref<16x32xbf16, #tpu.memory_space<vmem>>, %arg4: memref<32x96xbf16, #tpu.memory_space<vmem>>, %arg5: memref<16x96xbf16, #tpu.memory_space<vmem>>, %arg6: memref<16x96xf32, #tpu.memory_space<vmem>>) attributes {dimension_semantics = [#tpu.dimension_semantics<parallel>, #tpu.dimension_semantics<parallel>, #tpu.dimension_semantics<arbitrary>], iteration_bounds = array<i64: 1, 1, 1>, scalar_prefetch = 0 : i64, scratch_operands = 1 : i64, tpu.core_type = #tpu.core_type<tc>, window_params = [{transform_indices = @transform_0, window_bounds = array<i64: 16, 32>}, {transform_indices = @transform_1, window_bounds = array<i64: 32, 96>}, {transform_indices = @transform_2, window_bounds = array<i64: 16, 96>}]} {
    %c0_i32 = arith.constant 0 : i32
    %0 = arith.cmpi eq, %arg2, %c0_i32 : i32
    %1 = arith.extui %0 : i1 to i32
    %c0_i32_0 = arith.constant 0 : i32
    %2 = arith.cmpi ne, %1, %c0_i32_0 : i32
    scf.if %2 {
      %cst_10 = arith.constant 0.000000e+00 : f32
      %12 = vector.broadcast %cst_10 : f32 to vector<16x96xf32>
      %c0_11 = arith.constant 0 : index
      %c0_12 = arith.constant 0 : index
      %13 = vector.load %arg6[%c0_11, %c0_12] : memref<16x96xf32, #tpu.memory_space<vmem>>, vector<16x96xf32>
      tpu.vector_store %arg6[%c0_11, %c0_12], %12 {strides = array<i32>} : memref<16x96xf32, #tpu.memory_space<vmem>>, vector<16x96xf32>,
    } else {
    }
    %c0 = arith.constant 0 : index
    %c0_1 = arith.constant 0 : index
    %3 = vector.load %arg6[%c0, %c0_1] : memref<16x96xf32, #tpu.memory_space<vmem>>, vector<16x96xf32>
    %c0_2 = arith.constant 0 : index
    %c0_3 = arith.constant 0 : index
    %4 = vector.load %arg3[%c0_2, %c0_3] : memref<16x32xbf16, #tpu.memory_space<vmem>>, vector<16x32xbf16>
    %c0_4 = arith.constant 0 : index
    %c0_5 = arith.constant 0 : index
    %5 = vector.load %arg4[%c0_4, %c0_5] : memref<32x96xbf16, #tpu.memory_space<vmem>>, vector<32x96xbf16>
    %cst = arith.constant dense<0.000000e+00> : vector<16x96xf32>
    %6 = tpu.matmul %4, %5, %cst {dimension_numbers = #tpu.dot_dimension_numbers<[1], [0], [0], [1], [0, 0, 1, 1], [], []>} : vector<16x32xbf16>, vector<32x96xbf16>, vector<16x96xf32> -> vector<16x96xf32>
    %7 = arith.addf %3, %6 : vector<16x96xf32>
    %c0_6 = arith.constant 0 : index
    %c0_7 = arith.constant 0 : index
    %8 = vector.load %arg6[%c0_6, %c0_7] : memref<16x96xf32, #tpu.memory_space<vmem>>, vector<16x96xf32>
    tpu.vector_store %arg6[%c0_6, %c0_7], %7 {strides = array<i32>} : memref<16x96xf32, #tpu.memory_space<vmem>>, vector<16x96xf32>,
    %c0_i32_8 = arith.constant 0 : i32
    %9 = arith.cmpi eq, %arg2, %c0_i32_8 : i32
    %10 = arith.extui %9 : i1 to i32
    %c0_i32_9 = arith.constant 0 : i32
    %11 = arith.cmpi ne, %10, %c0_i32_9 : i32
    scf.if %11 {
      %c0_10 = arith.constant 0 : index
      %c0_11 = arith.constant 0 : index
      %12 = vector.load %arg6[%c0_10, %c0_11] : memref<16x96xf32, #tpu.memory_space<vmem>>, vector<16x96xf32>
      %13 = arith.truncf %12 : vector<16x96xf32> to vector<16x96xbf16>
      %c0_12 = arith.constant 0 : index
      %c0_13 = arith.constant 0 : index
      %14 = vector.load %arg5[%c0_12, %c0_13] : memref<16x96xbf16, #tpu.memory_space<vmem>>, vector<16x96xbf16>
      tpu.vector_store %arg5[%c0_12, %c0_13], %13 {strides = array<i32>} : memref<16x96xbf16, #tpu.memory_space<vmem>>, vector<16x96xbf16>,
    } else {
    }
    return
  }
  func.func @transform_0(%arg0: i32, %arg1: i32, %arg2: i32) -> (i32, i32) {
    %c0_i32 = arith.constant 0 : i32
    return %arg0, %arg2 : i32, i32
  }
  func.func @transform_1(%arg0: i32, %arg1: i32, %arg2: i32) -> (i32, i32) {
    %c0_i32 = arith.constant 0 : i32
    return %arg2, %arg1 : i32, i32
  }
  func.func @transform_2(%arg0: i32, %arg1: i32, %arg2: i32) -> (i32, i32) {
    %c0_i32 = arith.constant 0 : i32
    return %arg0, %arg1 : i32, i32
  }
}

module attributes {stable_mosaic.version = 11 : i64} {
  func.func @_attn_kernel(%arg0: i32, %arg1: memref<1x8x96xbf16, #tpu.memory_space<vmem>>, %arg2: memref<1x8x1xf32, #tpu.memory_space<vmem>>, %arg3: memref<1x1x8xf32, #tpu.memory_space<vmem>>, %arg4: memref<1x8x32xbf16, #tpu.memory_space<vmem>>) attributes {dimension_semantics = [#tpu.dimension_semantics<parallel>], iteration_bounds = array<i64: 2>, scalar_prefetch = 0 : i64, scratch_operands = 0 : i64, tpu.core_type = #tpu.core_type<tc>, window_params = [{transform_indices = @transform_0, window_bounds = array<i64: 1, 8, 96>}, {transform_indices = @transform_1, window_bounds = array<i64: 1, 8, 1>}, {transform_indices = @transform_2, window_bounds = array<i64: 1, 1, 8>}, {transform_indices = @transform_3, window_bounds = array<i64: 1, 8, 32>}]} {
    %c0 = arith.constant 0 : index
    %c0_0 = arith.constant 0 : index
    %c0_1 = arith.constant 0 : index
    %0 = vector.load %arg1[%c0, %c0_0, %c0_1] : memref<1x8x96xbf16, #tpu.memory_space<vmem>>, vector<1x8x96xbf16>
    %1 = vector.shape_cast %0 : vector<1x8x96xbf16> to vector<8x96xbf16>
    %c0_2 = arith.constant 0 : index
    %c0_3 = arith.constant 0 : index
    %c0_4 = arith.constant 0 : index
    %2 = vector.load %arg2[%c0_2, %c0_3, %c0_4] : memref<1x8x1xf32, #tpu.memory_space<vmem>>, vector<1x8x1xf32>
    %3 = vector.shape_cast %2 : vector<1x8x1xf32> to vector<8x1xf32>
    %c0_5 = arith.constant 0 : index
    %c0_6 = arith.constant 0 : index
    %c0_7 = arith.constant 0 : index
    %4 = vector.load %arg3[%c0_5, %c0_6, %c0_7] : memref<1x1x8xf32, #tpu.memory_space<vmem>>, vector<1x1x8xf32>
    %5 = vector.shape_cast %4 : vector<1x1x8xf32> to vector<1x8xf32>
    %cst = arith.constant 0.000000e+00 : f32
    %6 = vector.broadcast %cst : f32 to vector<1x8xf32>
    %7 = arith.cmpf ogt, %5, %6 : vector<1x8xf32>
    %cst_8 = arith.constant 0.000000e+00 : f32
    %8 = vector.broadcast %cst_8 : f32 to vector<8x1xf32>
    %9 = arith.cmpf ogt, %3, %8 : vector<8x1xf32>
    %10 = vector.broadcast %9 : vector<8x1xi1> to vector<8x8xi1>
    %11 = vector.broadcast %7 : vector<1x8xi1> to vector<8x8xi1>
    %12 = arith.andi %10, %11 : vector<8x8xi1>
    %13 = vector.extract_strided_slice %1 {offsets = [0, 0], sizes = [8, 4], strides = [1, 1]} : vector<8x96xbf16> to vector<8x4xbf16>
    %14 = vector.extract_strided_slice %1 {offsets = [0, 32], sizes = [8, 4], strides = [1, 1]} : vector<8x96xbf16> to vector<8x4xbf16>
    %15 = vector.extract_strided_slice %1 {offsets = [0, 64], sizes = [8, 4], strides = [1, 1]} : vector<8x96xbf16> to vector<8x4xbf16>
    %16 = arith.extf %13 : vector<8x4xbf16> to vector<8x4xf32>
    %cst_9 = arith.constant 5.000000e-01 : f32
    %17 = vector.broadcast %cst_9 : f32 to vector<8x4xf32>
    %18 = arith.mulf %16, %17 : vector<8x4xf32>
    %19 = arith.truncf %18 : vector<8x4xf32> to vector<8x4xbf16>
    %cst_10 = arith.constant dense<0.000000e+00> : vector<8x8xf32>
    %20 = tpu.matmul %19, %14, %cst_10 {dimension_numbers = #tpu.dot_dimension_numbers<[1], [1], [0], [0], [0, 0, 1, 0], [], []>} : vector<8x4xbf16>, vector<8x4xbf16>, vector<8x8xf32> -> vector<8x8xf32>
    %cst_11 = arith.constant -3.40282347E+38 : f32
    %21 = vector.broadcast %cst_11 : f32 to vector<8x8xf32>
    %22 = arith.select %12, %20, %21 : vector<8x8xi1>, vector<8x8xf32>
    %cst_12 = arith.constant dense<0xFF800000> : vector<8xf32>
    %23 = vector.multi_reduction <maximumf>, %22, %cst_12 [1] : vector<8x8xf32> to vector<8xf32>
    %24 = vector.shape_cast %23 : vector<8xf32> to vector<8x1xf32>
    %25 = vector.broadcast %24 : vector<8x1xf32> to vector<8x8xf32>
    %26 = arith.subf %22, %25 : vector<8x8xf32>
    %27 = math.exp %26 : vector<8x8xf32>
    %cst_13 = arith.constant dense<0.000000e+00> : vector<8xf32>
    %28 = vector.multi_reduction <add>, %27, %cst_13 [1] : vector<8x8xf32> to vector<8xf32>
    %29 = vector.shape_cast %28 : vector<8xf32> to vector<8x1xf32>
    %30 = tpu.reciprocal %29 {approx = true} : vector<8x1xf32> -> vector<8x1xf32>
    %31 = vector.broadcast %30 : vector<8x1xf32> to vector<8x8xf32>
    %32 = arith.mulf %27, %31 : vector<8x8xf32>
    %33 = arith.truncf %32 : vector<8x8xf32> to vector<8x8xbf16>
    %cst_14 = arith.constant dense<0.000000e+00> : vector<8x4xf32>
    %34 = tpu.matmul %33, %15, %cst_14 {dimension_numbers = #tpu.dot_dimension_numbers<[1], [0], [0], [1], [0, 0, 1, 1], [], []>} : vector<8x8xbf16>, vector<8x4xbf16>, vector<8x4xf32> -> vector<8x4xf32>
    %35 = arith.truncf %34 : vector<8x4xf32> to vector<8x4xbf16>
    %c0_15 = arith.constant 0 : index
    %c0_16 = arith.constant 0 : index
    %c0_17 = arith.constant 0 : index
    %36 = vector.load %arg4[%c0_15, %c0_16, %c0_17] : memref<1x8x32xbf16, #tpu.memory_space<vmem>>, vector<1x8x4xbf16>
    %37 = vector.shape_cast %36 : vector<1x8x4xbf16> to vector<8x4xbf16>
    %38 = vector.shape_cast %35 : vector<8x4xbf16> to vector<1x8x4xbf16>
    tpu.vector_store %arg4[%c0_15, %c0_16, %c0_17], %38 {strides = array<i32>} : memref<1x8x32xbf16, #tpu.memory_space<vmem>>, vector<1x8x4xbf16>,
    %39 = vector.extract_strided_slice %1 {offsets = [0, 4], sizes = [8, 4], strides = [1, 1]} : vector<8x96xbf16> to vector<8x4xbf16>
    %40 = vector.extract_strided_slice %1 {offsets = [0, 36], sizes = [8, 4], strides = [1, 1]} : vector<8x96xbf16> to vector<8x4xbf16>
    %41 = vector.extract_strided_slice %1 {offsets = [0, 68], sizes = [8, 4], strides = [1, 1]} : vector<8x96xbf16> to vector<8x4xbf16>
    %42 = arith.extf %39 : vector<8x4xbf16> to vector<8x4xf32>
    %cst_18 = arith.constant 5.000000e-01 : f32
    %43 = vector.broadcast %cst_18 : f32 to vector<8x4xf32>
    %44 = arith.mulf %42, %43 : vector<8x4xf32>
    %45 = arith.truncf %44 : vector<8x4xf32> to vector<8x4xbf16>
    %cst_19 = arith.constant dense<0.000000e+00> : vector<8x8xf32>
    %46 = tpu.matmul %45, %40, %cst_19 {dimension_numbers = #tpu.dot_dimension_numbers<[1], [1], [0], [0], [0, 0, 1, 0], [], []>} : vector<8x4xbf16>, vector<8x4xbf16>, vector<8x8xf32> -> vector<8x8xf32>
    %cst_20 = arith.constant -3.40282347E+38 : f32
    %47 = vector.broadcast %cst_20 : f32 to vector<8x8xf32>
    %48 = arith.select %12, %46, %47 : vector<8x8xi1>, vector<8x8xf32>
    %cst_21 = arith.constant dense<0xFF800000> : vector<8xf32>
    %49 = vector.multi_reduction <maximumf>, %48, %cst_21 [1] : vector<8x8xf32> to vector<8xf32>
    %50 = vector.shape_cast %49 : vector<8xf32> to vector<8x1xf32>
    %51 = vector.broadcast %50 : vector<8x1xf32> to vector<8x8xf32>
    %52 = arith.subf %48, %51 : vector<8x8xf32>
    %53 = math.exp %52 : vector<8x8xf32>
    %cst_22 = arith.constant dense<0.000000e+00> : vector<8xf32>
    %54 = vector.multi_reduction <add>, %53, %cst_22 [1] : vector<8x8xf32> to vector<8xf32>
    %55 = vector.shape_cast %54 : vector<8xf32> to vector<8x1xf32>
    %56 = tpu.reciprocal %55 {approx = true} : vector<8x1xf32> -> vector<8x1xf32>
    %57 = vector.broadcast %56 : vector<8x1xf32> to vector<8x8xf32>
    %58 = arith.mulf %53, %57 : vector<8x8xf32>
    %59 = arith.truncf %58 : vector<8x8xf32> to vector<8x8xbf16>
    %cst_23 = arith.constant dense<0.000000e+00> : vector<8x4xf32>
    %60 = tpu.matmul %59, %41, %cst_23 {dimension_numbers = #tpu.dot_dimension_numbers<[1], [0], [0], [1], [0, 0, 1, 1], [], []>} : vector<8x8xbf16>, vector<8x4xbf16>, vector<8x4xf32> -> vector<8x4xf32>
    %61 = arith.truncf %60 : vector<8x4xf32> to vector<8x4xbf16>
    %c0_24 = arith.constant 0 : index
    %c0_25 = arith.constant 0 : index
    %c4 = arith.constant 4 : index
    %62 = vector.load %arg4[%c0_24, %c0_25, %c4] : memref<1x8x32xbf16, #tpu.memory_space<vmem>>, vector<1x8x4xbf16>
    %63 = vector.shape_cast %62 : vector<1x8x4xbf16> to vector<8x4xbf16>
    %64 = vector.shape_cast %61 : vector<8x4xbf16> to vector<1x8x4xbf16>
    tpu.vector_store %arg4[%c0_24, %c0_25, %c4], %64 {strides = array<i32>} : memref<1x8x32xbf16, #tpu.memory_space<vmem>>, vector<1x8x4xbf16>,
    %65 = vector.extract_strided_slice %1 {offsets = [0, 8], sizes = [8, 4], strides = [1, 1]} : vector<8x96xbf16> to vector<8x4xbf16>
    %66 = vector.extract_strided_slice %1 {offsets = [0, 40], sizes = [8, 4], strides = [1, 1]} : vector<8x96xbf16> to vector<8x4xbf16>
    %67 = vector.extract_strided_slice %1 {offsets = [0, 72], sizes = [8, 4], strides = [1, 1]} : vector<8x96xbf16> to vector<8x4xbf16>
    %68 = arith.extf %65 : vector<8x4xbf16> to vector<8x4xf32>
    %cst_26 = arith.constant 5.000000e-01 : f32
    %69 = vector.broadcast %cst_26 : f32 to vector<8x4xf32>
    %70 = arith.mulf %68, %69 : vector<8x4xf32>
    %71 = arith.truncf %70 : vector<8x4xf32> to vector<8x4xbf16>
    %cst_27 = arith.constant dense<0.000000e+00> : vector<8x8xf32>
    %72 = tpu.matmul %71, %66, %cst_27 {dimension_numbers = #tpu.dot_dimension_numbers<[1], [1], [0], [0], [0, 0, 1, 0], [], []>} : vector<8x4xbf16>, vector<8x4xbf16>, vector<8x8xf32> -> vector<8x8xf32>
    %cst_28 = arith.constant -3.40282347E+38 : f32
    %73 = vector.broadcast %cst_28 : f32 to vector<8x8xf32>
    %74 = arith.select %12, %72, %73 : vector<8x8xi1>, vector<8x8xf32>
    %cst_29 = arith.constant dense<0xFF800000> : vector<8xf32>
    %75 = vector.multi_reduction <maximumf>, %74, %cst_29 [1] : vector<8x8xf32> to vector<8xf32>
    %76 = vector.shape_cast %75 : vector<8xf32> to vector<8x1xf32>
    %77 = vector.broadcast %76 : vector<8x1xf32> to vector<8x8xf32>
    %78 = arith.subf %74, %77 : vector<8x8xf32>
    %79 = math.exp %78 : vector<8x8xf32>
    %cst_30 = arith.constant dense<0.000000e+00> : vector<8xf32>
    %80 = vector.multi_reduction <add>, %79, %cst_30 [1] : vector<8x8xf32> to vector<8xf32>
    %81 = vector.shape_cast %80 : vector<8xf32> to vector<8x1xf32>
    %82 = tpu.reciprocal %81 {approx = true} : vector<8x1xf32> -> vector<8x1xf32>
    %83 = vector.broadcast %82 : vector<8x1xf32> to vector<8x8xf32>
    %84 = arith.mulf %79, %83 : vector<8x8xf32>
    %85 = arith.truncf %84 : vector<8x8xf32> to vector<8x8xbf16>
    %cst_31 = arith.constant dense<0.000000e+00> : vector<8x4xf32>
    %86 = tpu.matmul %85, %67, %cst_31 {dimension_numbers = #tpu.dot_dimension_numbers<[1], [0], [0], [1], [0, 0, 1, 1], [], []>} : vector<8x8xbf16>, vector<8x4xbf16>, vector<8x4xf32> -> vector<8x4xf32>
    %87 = arith.truncf %86 : vector<8x4xf32> to vector<8x4xbf16>
    %c0_32 = arith.constant 0 : index
    %c0_33 = arith.constant 0 : index
    %c8 = arith.constant 8 : index
    %88 = vector.load %arg4[%c0_32, %c0_33, %c8] : memref<1x8x32xbf16, #tpu.memory_space<vmem>>, vector<1x8x4xbf16>
    %89 = vector.shape_cast %88 : vector<1x8x4xbf16> to vector<8x4xbf16>
    %90 = vector.shape_cast %87 : vector<8x4xbf16> to vector<1x8x4xbf16>
    tpu.vector_store %arg4[%c0_32, %c0_33, %c8], %90 {strides = array<i32>} : memref<1x8x32xbf16, #tpu.memory_space<vmem>>, vector<1x8x4xbf16>,
    %91 = vector.extract_strided_slice %1 {offsets = [0, 12], sizes = [8, 4], strides = [1, 1]} : vector<8x96xbf16> to vector<8x4xbf16>
    %92 = vector.extract_strided_slice %1 {offsets = [0, 44], sizes = [8, 4], strides = [1, 1]} : vector<8x96xbf16> to vector<8x4xbf16>
    %93 = vector.extract_strided_slice %1 {offsets = [0, 76], sizes = [8, 4], strides = [1, 1]} : vector<8x96xbf16> to vector<8x4xbf16>
    %94 = arith.extf %91 : vector<8x4xbf16> to vector<8x4xf32>
    %cst_34 = arith.constant 5.000000e-01 : f32
    %95 = vector.broadcast %cst_34 : f32 to vector<8x4xf32>
    %96 = arith.mulf %94, %95 : vector<8x4xf32>
    %97 = arith.truncf %96 : vector<8x4xf32> to vector<8x4xbf16>
    %cst_35 = arith.constant dense<0.000000e+00> : vector<8x8xf32>
    %98 = tpu.matmul %97, %92, %cst_35 {dimension_numbers = #tpu.dot_dimension_numbers<[1], [1], [0], [0], [0, 0, 1, 0], [], []>} : vector<8x4xbf16>, vector<8x4xbf16>, vector<8x8xf32> -> vector<8x8xf32>
    %cst_36 = arith.constant -3.40282347E+38 : f32
    %99 = vector.broadcast %cst_36 : f32 to vector<8x8xf32>
    %100 = arith.select %12, %98, %99 : vector<8x8xi1>, vector<8x8xf32>
    %cst_37 = arith.constant dense<0xFF800000> : vector<8xf32>
    %101 = vector.multi_reduction <maximumf>, %100, %cst_37 [1] : vector<8x8xf32> to vector<8xf32>
    %102 = vector.shape_cast %101 : vector<8xf32> to vector<8x1xf32>
    %103 = vector.broadcast %102 : vector<8x1xf32> to vector<8x8xf32>
    %104 = arith.subf %100, %103 : vector<8x8xf32>
    %105 = math.exp %104 : vector<8x8xf32>
    %cst_38 = arith.constant dense<0.000000e+00> : vector<8xf32>
    %106 = vector.multi_reduction <add>, %105, %cst_38 [1] : vector<8x8xf32> to vector<8xf32>
    %107 = vector.shape_cast %106 : vector<8xf32> to vector<8x1xf32>
    %108 = tpu.reciprocal %107 {approx = true} : vector<8x1xf32> -> vector<8x1xf32>
    %109 = vector.broadcast %108 : vector<8x1xf32> to vector<8x8xf32>
    %110 = arith.mulf %105, %109 : vector<8x8xf32>
    %111 = arith.truncf %110 : vector<8x8xf32> to vector<8x8xbf16>
    %cst_39 = arith.constant dense<0.000000e+00> : vector<8x4xf32>
    %112 = tpu.matmul %111, %93, %cst_39 {dimension_numbers = #tpu.dot_dimension_numbers<[1], [0], [0], [1], [0, 0, 1, 1], [], []>} : vector<8x8xbf16>, vector<8x4xbf16>, vector<8x4xf32> -> vector<8x4xf32>
    %113 = arith.truncf %112 : vector<8x4xf32> to vector<8x4xbf16>
    %c0_40 = arith.constant 0 : index
    %c0_41 = arith.constant 0 : index
    %c12 = arith.constant 12 : index
    %114 = vector.load %arg4[%c0_40, %c0_41, %c12] : memref<1x8x32xbf16, #tpu.memory_space<vmem>>, vector<1x8x4xbf16>
    %115 = vector.shape_cast %114 : vector<1x8x4xbf16> to vector<8x4xbf16>
    %116 = vector.shape_cast %113 : vector<8x4xbf16> to vector<1x8x4xbf16>
    tpu.vector_store %arg4[%c0_40, %c0_41, %c12], %116 {strides = array<i32>} : memref<1x8x32xbf16, #tpu.memory_space<vmem>>, vector<1x8x4xbf16>,
    %117 = vector.extract_strided_slice %1 {offsets = [0, 16], sizes = [8, 4], strides = [1, 1]} : vector<8x96xbf16> to vector<8x4xbf16>
    %118 = vector.extract_strided_slice %1 {offsets = [0, 48], sizes = [8, 4], strides = [1, 1]} : vector<8x96xbf16> to vector<8x4xbf16>
    %119 = vector.extract_strided_slice %1 {offsets = [0, 80], sizes = [8, 4], strides = [1, 1]} : vector<8x96xbf16> to vector<8x4xbf16>
    %120 = arith.extf %117 : vector<8x4xbf16> to vector<8x4xf32>
    %cst_42 = arith.constant 5.000000e-01 : f32
    %121 = vector.broadcast %cst_42 : f32 to vector<8x4xf32>
    %122 = arith.mulf %120, %121 : vector<8x4xf32>
    %123 = arith.truncf %122 : vector<8x4xf32> to vector<8x4xbf16>
    %cst_43 = arith.constant dense<0.000000e+00> : vector<8x8xf32>
    %124 = tpu.matmul %123, %118, %cst_43 {dimension_numbers = #tpu.dot_dimension_numbers<[1], [1], [0], [0], [0, 0, 1, 0], [], []>} : vector<8x4xbf16>, vector<8x4xbf16>, vector<8x8xf32> -> vector<8x8xf32>
    %cst_44 = arith.constant -3.40282347E+38 : f32
    %125 = vector.broadcast %cst_44 : f32 to vector<8x8xf32>
    %126 = arith.select %12, %124, %125 : vector<8x8xi1>, vector<8x8xf32>
    %cst_45 = arith.constant dense<0xFF800000> : vector<8xf32>
    %127 = vector.multi_reduction <maximumf>, %126, %cst_45 [1] : vector<8x8xf32> to vector<8xf32>
    %128 = vector.shape_cast %127 : vector<8xf32> to vector<8x1xf32>
    %129 = vector.broadcast %128 : vector<8x1xf32> to vector<8x8xf32>
    %130 = arith.subf %126, %129 : vector<8x8xf32>
    %131 = math.exp %130 : vector<8x8xf32>
    %cst_46 = arith.constant dense<0.000000e+00> : vector<8xf32>
    %132 = vector.multi_reduction <add>, %131, %cst_46 [1] : vector<8x8xf32> to vector<8xf32>
    %133 = vector.shape_cast %132 : vector<8xf32> to vector<8x1xf32>
    %134 = tpu.reciprocal %133 {approx = true} : vector<8x1xf32> -> vector<8x1xf32>
    %135 = vector.broadcast %134 : vector<8x1xf32> to vector<8x8xf32>
    %136 = arith.mulf %131, %135 : vector<8x8xf32>
    %137 = arith.truncf %136 : vector<8x8xf32> to vector<8x8xbf16>
    %cst_47 = arith.constant dense<0.000000e+00> : vector<8x4xf32>
    %138 = tpu.matmul %137, %119, %cst_47 {dimension_numbers = #tpu.dot_dimension_numbers<[1], [0], [0], [1], [0, 0, 1, 1], [], []>} : vector<8x8xbf16>, vector<8x4xbf16>, vector<8x4xf32> -> vector<8x4xf32>
    %139 = arith.truncf %138 : vector<8x4xf32> to vector<8x4xbf16>
    %c0_48 = arith.constant 0 : index
    %c0_49 = arith.constant 0 : index
    %c16 = arith.constant 16 : index
    %140 = vector.load %arg4[%c0_48, %c0_49, %c16] : memref<1x8x32xbf16, #tpu.memory_space<vmem>>, vector<1x8x4xbf16>
    %141 = vector.shape_cast %140 : vector<1x8x4xbf16> to vector<8x4xbf16>
    %142 = vector.shape_cast %139 : vector<8x4xbf16> to vector<1x8x4xbf16>
    tpu.vector_store %arg4[%c0_48, %c0_49, %c16], %142 {strides = array<i32>} : memref<1x8x32xbf16, #tpu.memory_space<vmem>>, vector<1x8x4xbf16>,
    %143 = vector.extract_strided_slice %1 {offsets = [0, 20], sizes = [8, 4], strides = [1, 1]} : vector<8x96xbf16> to vector<8x4xbf16>
    %144 = vector.extract_strided_slice %1 {offsets = [0, 52], sizes = [8, 4], strides = [1, 1]} : vector<8x96xbf16> to vector<8x4xbf16>
    %145 = vector.extract_strided_slice %1 {offsets = [0, 84], sizes = [8, 4], strides = [1, 1]} : vector<8x96xbf16> to vector<8x4xbf16>
    %146 = arith.extf %143 : vector<8x4xbf16> to vector<8x4xf32>
    %cst_50 = arith.constant 5.000000e-01 : f32
    %147 = vector.broadcast %cst_50 : f32 to vector<8x4xf32>
    %148 = arith.mulf %146, %147 : vector<8x4xf32>
    %149 = arith.truncf %148 : vector<8x4xf32> to vector<8x4xbf16>
    %cst_51 = arith.constant dense<0.000000e+00> : vector<8x8xf32>
    %150 = tpu.matmul %149, %144, %cst_51 {dimension_numbers = #tpu.dot_dimension_numbers<[1], [1], [0], [0], [0, 0, 1, 0], [], []>} : vector<8x4xbf16>, vector<8x4xbf16>, vector<8x8xf32> -> vector<8x8xf32>
    %cst_52 = arith.constant -3.40282347E+38 : f32
    %151 = vector.broadcast %cst_52 : f32 to vector<8x8xf32>
    %152 = arith.select %12, %150, %151 : vector<8x8xi1>, vector<8x8xf32>
    %cst_53 = arith.constant dense<0xFF800000> : vector<8xf32>
    %153 = vector.multi_reduction <maximumf>, %152, %cst_53 [1] : vector<8x8xf32> to vector<8xf32>
    %154 = vector.shape_cast %153 : vector<8xf32> to vector<8x1xf32>
    %155 = vector.broadcast %154 : vector<8x1xf32> to vector<8x8xf32>
    %156 = arith.subf %152, %155 : vector<8x8xf32>
    %157 = math.exp %156 : vector<8x8xf32>
    %cst_54 = arith.constant dense<0.000000e+00> : vector<8xf32>
    %158 = vector.multi_reduction <add>, %157, %cst_54 [1] : vector<8x8xf32> to vector<8xf32>
    %159 = vector.shape_cast %158 : vector<8xf32> to vector<8x1xf32>
    %160 = tpu.reciprocal %159 {approx = true} : vector<8x1xf32> -> vector<8x1xf32>
    %161 = vector.broadcast %160 : vector<8x1xf32> to vector<8x8xf32>
    %162 = arith.mulf %157, %161 : vector<8x8xf32>
    %163 = arith.truncf %162 : vector<8x8xf32> to vector<8x8xbf16>
    %cst_55 = arith.constant dense<0.000000e+00> : vector<8x4xf32>
    %164 = tpu.matmul %163, %145, %cst_55 {dimension_numbers = #tpu.dot_dimension_numbers<[1], [0], [0], [1], [0, 0, 1, 1], [], []>} : vector<8x8xbf16>, vector<8x4xbf16>, vector<8x4xf32> -> vector<8x4xf32>
    %165 = arith.truncf %164 : vector<8x4xf32> to vector<8x4xbf16>
    %c0_56 = arith.constant 0 : index
    %c0_57 = arith.constant 0 : index
    %c20 = arith.constant 20 : index
    %166 = vector.load %arg4[%c0_56, %c0_57, %c20] : memref<1x8x32xbf16, #tpu.memory_space<vmem>>, vector<1x8x4xbf16>
    %167 = vector.shape_cast %166 : vector<1x8x4xbf16> to vector<8x4xbf16>
    %168 = vector.shape_cast %165 : vector<8x4xbf16> to vector<1x8x4xbf16>
    tpu.vector_store %arg4[%c0_56, %c0_57, %c20], %168 {strides = array<i32>} : memref<1x8x32xbf16, #tpu.memory_space<vmem>>, vector<1x8x4xbf16>,
    %169 = vector.extract_strided_slice %1 {offsets = [0, 24], sizes = [8, 4], strides = [1, 1]} : vector<8x96xbf16> to vector<8x4xbf16>
    %170 = vector.extract_strided_slice %1 {offsets = [0, 56], sizes = [8, 4], strides = [1, 1]} : vector<8x96xbf16> to vector<8x4xbf16>
    %171 = vector.extract_strided_slice %1 {offsets = [0, 88], sizes = [8, 4], strides = [1, 1]} : vector<8x96xbf16> to vector<8x4xbf16>
    %172 = arith.extf %169 : vector<8x4xbf16> to vector<8x4xf32>
    %cst_58 = arith.constant 5.000000e-01 : f32
    %173 = vector.broadcast %cst_58 : f32 to vector<8x4xf32>
    %174 = arith.mulf %172, %173 : vector<8x4xf32>
    %175 = arith.truncf %174 : vector<8x4xf32> to vector<8x4xbf16>
    %cst_59 = arith.constant dense<0.000000e+00> : vector<8x8xf32>
    %176 = tpu.matmul %175, %170, %cst_59 {dimension_numbers = #tpu.dot_dimension_numbers<[1], [1], [0], [0], [0, 0, 1, 0], [], []>} : vector<8x4xbf16>, vector<8x4xbf16>, vector<8x8xf32> -> vector<8x8xf32>
    %cst_60 = arith.constant -3.40282347E+38 : f32
    %177 = vector.broadcast %cst_60 : f32 to vector<8x8xf32>
    %178 = arith.select %12, %176, %177 : vector<8x8xi1>, vector<8x8xf32>
    %cst_61 = arith.constant dense<0xFF800000> : vector<8xf32>
    %179 = vector.multi_reduction <maximumf>, %178, %cst_61 [1] : vector<8x8xf32> to vector<8xf32>
    %180 = vector.shape_cast %179 : vector<8xf32> to vector<8x1xf32>
    %181 = vector.broadcast %180 : vector<8x1xf32> to vector<8x8xf32>
    %182 = arith.subf %178, %181 : vector<8x8xf32>
    %183 = math.exp %182 : vector<8x8xf32>
    %cst_62 = arith.constant dense<0.000000e+00> : vector<8xf32>
    %184 = vector.multi_reduction <add>, %183, %cst_62 [1] : vector<8x8xf32> to vector<8xf32>
    %185 = vector.shape_cast %184 : vector<8xf32> to vector<8x1xf32>
    %186 = tpu.reciprocal %185 {approx = true} : vector<8x1xf32> -> vector<8x1xf32>
    %187 = vector.broadcast %186 : vector<8x1xf32> to vector<8x8xf32>
    %188 = arith.mulf %183, %187 : vector<8x8xf32>
    %189 = arith.truncf %188 : vector<8x8xf32> to vector<8x8xbf16>
    %cst_63 = arith.constant dense<0.000000e+00> : vector<8x4xf32>
    %190 = tpu.matmul %189, %171, %cst_63 {dimension_numbers = #tpu.dot_dimension_numbers<[1], [0], [0], [1], [0, 0, 1, 1], [], []>} : vector<8x8xbf16>, vector<8x4xbf16>, vector<8x4xf32> -> vector<8x4xf32>
    %191 = arith.truncf %190 : vector<8x4xf32> to vector<8x4xbf16>
    %c0_64 = arith.constant 0 : index
    %c0_65 = arith.constant 0 : index
    %c24 = arith.constant 24 : index
    %192 = vector.load %arg4[%c0_64, %c0_65, %c24] : memref<1x8x32xbf16, #tpu.memory_space<vmem>>, vector<1x8x4xbf16>
    %193 = vector.shape_cast %192 : vector<1x8x4xbf16> to vector<8x4xbf16>
    %194 = vector.shape_cast %191 : vector<8x4xbf16> to vector<1x8x4xbf16>
    tpu.vector_store %arg4[%c0_64, %c0_65, %c24], %194 {strides = array<i32>} : memref<1x8x32xbf16, #tpu.memory_space<vmem>>, vector<1x8x4xbf16>,
    %195 = vector.extract_strided_slice %1 {offsets = [0, 28], sizes = [8, 4], strides = [1, 1]} : vector<8x96xbf16> to vector<8x4xbf16>
    %196 = vector.extract_strided_slice %1 {offsets = [0, 60], sizes = [8, 4], strides = [1, 1]} : vector<8x96xbf16> to vector<8x4xbf16>
    %197 = vector.extract_strided_slice %1 {offsets = [0, 92], sizes = [8, 4], strides = [1, 1]} : vector<8x96xbf16> to vector<8x4xbf16>
    %198 = arith.extf %195 : vector<8x4xbf16> to vector<8x4xf32>
    %cst_66 = arith.constant 5.000000e-01 : f32
    %199 = vector.broadcast %cst_66 : f32 to vector<8x4xf32>
    %200 = arith.mulf %198, %199 : vector<8x4xf32>
    %201 = arith.truncf %200 : vector<8x4xf32> to vector<8x4xbf16>
    %cst_67 = arith.constant dense<0.000000e+00> : vector<8x8xf32>
    %202 = tpu.matmul %201, %196, %cst_67 {dimension_numbers = #tpu.dot_dimension_numbers<[1], [1], [0], [0], [0, 0, 1, 0], [], []>} : vector<8x4xbf16>, vector<8x4xbf16>, vector<8x8xf32> -> vector<8x8xf32>
    %cst_68 = arith.constant -3.40282347E+38 : f32
    %203 = vector.broadcast %cst_68 : f32 to vector<8x8xf32>
    %204 = arith.select %12, %202, %203 : vector<8x8xi1>, vector<8x8xf32>
    %cst_69 = arith.constant dense<0xFF800000> : vector<8xf32>
    %205 = vector.multi_reduction <maximumf>, %204, %cst_69 [1] : vector<8x8xf32> to vector<8xf32>
    %206 = vector.shape_cast %205 : vector<8xf32> to vector<8x1xf32>
    %207 = vector.broadcast %206 : vector<8x1xf32> to vector<8x8xf32>
    %208 = arith.subf %204, %207 : vector<8x8xf32>
    %209 = math.exp %208 : vector<8x8xf32>
    %cst_70 = arith.constant dense<0.000000e+00> : vector<8xf32>
    %210 = vector.multi_reduction <add>, %209, %cst_70 [1] : vector<8x8xf32> to vector<8xf32>
    %211 = vector.shape_cast %210 : vector<8xf32> to vector<8x1xf32>
    %212 = tpu.reciprocal %211 {approx = true} : vector<8x1xf32> -> vector<8x1xf32>
    %213 = vector.broadcast %212 : vector<8x1xf32> to vector<8x8xf32>
    %214 = arith.mulf %209, %213 : vector<8x8xf32>
    %215 = arith.truncf %214 : vector<8x8xf32> to vector<8x8xbf16>
    %cst_71 = arith.constant dense<0.000000e+00> : vector<8x4xf32>
    %216 = tpu.matmul %215, %197, %cst_71 {dimension_numbers = #tpu.dot_dimension_numbers<[1], [0], [0], [1], [0, 0, 1, 1], [], []>} : vector<8x8xbf16>, vector<8x4xbf16>, vector<8x4xf32> -> vector<8x4xf32>
    %217 = arith.truncf %216 : vector<8x4xf32> to vector<8x4xbf16>
    %c0_72 = arith.constant 0 : index
    %c0_73 = arith.constant 0 : index
    %c28 = arith.constant 28 : index
    %218 = vector.load %arg4[%c0_72, %c0_73, %c28] : memref<1x8x32xbf16, #tpu.memory_space<vmem>>, vector<1x8x4xbf16>
    %219 = vector.shape_cast %218 : vector<1x8x4xbf16> to vector<8x4xbf16>
    %220 = vector.shape_cast %217 : vector<8x4xbf16> to vector<1x8x4xbf16>
    tpu.vector_store %arg4[%c0_72, %c0_73, %c28], %220 {strides = array<i32>} : memref<1x8x32xbf16, #tpu.memory_space<vmem>>, vector<1x8x4xbf16>,
    return
  }
  func.func @transform_0(%arg0: i32) -> (i32, i32, i32) {
    %c0_i32 = arith.constant 0 : i32
    %c0_i32_0 = arith.constant 0 : i32
    %c0_i32_1 = arith.constant 0 : i32
    return %arg0, %c0_i32, %c0_i32_0 : i32, i32, i32
  }
  func.func @transform_1(%arg0: i32) -> (i32, i32, i32) {
    %c0_i32 = arith.constant 0 : i32
    %c0_i32_0 = arith.constant 0 : i32
    %c0_i32_1 = arith.constant 0 : i32
    return %arg0, %c0_i32, %c0_i32_0 : i32, i32, i32
  }
  func.func @transform_2(%arg0: i32) -> (i32, i32, i32) {
    %c0_i32 = arith.constant 0 : i32
    %c0_i32_0 = arith.constant 0 : i32
    %c0_i32_1 = arith.constant 0 : i32
    return %arg0, %c0_i32, %c0_i32_0 : i32, i32, i32
  }
  func.func @transform_3(%arg0: i32) -> (i32, i32, i32) {
    %c0_i32 = arith.constant 0 : i32
    %c0_i32_0 = arith.constant 0 : i32
    %c0_i32_1 = arith.constant 0 : i32
    return %arg0, %c0_i32, %c0_i32_0 : i32, i32, i32
  }
}

module attributes {stable_mosaic.version = 11 : i64} {
  func.func @_matmul_bias_kernel(%arg0: i32, %arg1: i32, %arg2: i32, %arg3: memref<16x32xbf16, #tpu.memory_space<vmem>>, %arg4: memref<32x32xbf16, #tpu.memory_space<vmem>>, %arg5: memref<1x32xf32, #tpu.memory_space<vmem>>, %arg6: memref<16x32xf32, #tpu.memory_space<vmem>>, %arg7: memref<16x32xf32, #tpu.memory_space<vmem>>) attributes {dimension_semantics = [#tpu.dimension_semantics<parallel>, #tpu.dimension_semantics<parallel>, #tpu.dimension_semantics<arbitrary>], iteration_bounds = array<i64: 1, 1, 1>, scalar_prefetch = 0 : i64, scratch_operands = 1 : i64, tpu.core_type = #tpu.core_type<tc>, window_params = [{transform_indices = @transform_0, window_bounds = array<i64: 16, 32>}, {transform_indices = @transform_1, window_bounds = array<i64: 32, 32>}, {transform_indices = @transform_2, window_bounds = array<i64: 1, 32>}, {transform_indices = @transform_3, window_bounds = array<i64: 16, 32>}]} {
    %c0_i32 = arith.constant 0 : i32
    %0 = arith.cmpi eq, %arg2, %c0_i32 : i32
    %1 = arith.extui %0 : i1 to i32
    %c0_i32_0 = arith.constant 0 : i32
    %2 = arith.cmpi ne, %1, %c0_i32_0 : i32
    scf.if %2 {
      %cst_10 = arith.constant 0.000000e+00 : f32
      %12 = vector.broadcast %cst_10 : f32 to vector<16x32xf32>
      %c0_11 = arith.constant 0 : index
      %c0_12 = arith.constant 0 : index
      %13 = vector.load %arg7[%c0_11, %c0_12] : memref<16x32xf32, #tpu.memory_space<vmem>>, vector<16x32xf32>
      tpu.vector_store %arg7[%c0_11, %c0_12], %12 {strides = array<i32>} : memref<16x32xf32, #tpu.memory_space<vmem>>, vector<16x32xf32>,
    } else {
    }
    %c0 = arith.constant 0 : index
    %c0_1 = arith.constant 0 : index
    %3 = vector.load %arg7[%c0, %c0_1] : memref<16x32xf32, #tpu.memory_space<vmem>>, vector<16x32xf32>
    %c0_2 = arith.constant 0 : index
    %c0_3 = arith.constant 0 : index
    %4 = vector.load %arg3[%c0_2, %c0_3] : memref<16x32xbf16, #tpu.memory_space<vmem>>, vector<16x32xbf16>
    %c0_4 = arith.constant 0 : index
    %c0_5 = arith.constant 0 : index
    %5 = vector.load %arg4[%c0_4, %c0_5] : memref<32x32xbf16, #tpu.memory_space<vmem>>, vector<32x32xbf16>
    %cst = arith.constant dense<0.000000e+00> : vector<16x32xf32>
    %6 = tpu.matmul %4, %5, %cst {dimension_numbers = #tpu.dot_dimension_numbers<[1], [0], [0], [1], [0, 0, 1, 1], [], []>} : vector<16x32xbf16>, vector<32x32xbf16>, vector<16x32xf32> -> vector<16x32xf32>
    %7 = arith.addf %3, %6 : vector<16x32xf32>
    %c0_6 = arith.constant 0 : index
    %c0_7 = arith.constant 0 : index
    %8 = vector.load %arg7[%c0_6, %c0_7] : memref<16x32xf32, #tpu.memory_space<vmem>>, vector<16x32xf32>
    tpu.vector_store %arg7[%c0_6, %c0_7], %7 {strides = array<i32>} : memref<16x32xf32, #tpu.memory_space<vmem>>, vector<16x32xf32>,
    %c0_i32_8 = arith.constant 0 : i32
    %9 = arith.cmpi eq, %arg2, %c0_i32_8 : i32
    %10 = arith.extui %9 : i1 to i32
    %c0_i32_9 = arith.constant 0 : i32
    %11 = arith.cmpi ne, %10, %c0_i32_9 : i32
    scf.if %11 {
      %c0_10 = arith.constant 0 : index
      %c0_11 = arith.constant 0 : index
      %12 = vector.load %arg7[%c0_10, %c0_11] : memref<16x32xf32, #tpu.memory_space<vmem>>, vector<16x32xf32>
      %c0_12 = arith.constant 0 : index
      %c0_13 = arith.constant 0 : index
      %13 = vector.load %arg5[%c0_12, %c0_13] : memref<1x32xf32, #tpu.memory_space<vmem>>, vector<1x32xf32>
      %14 = vector.broadcast %13 : vector<1x32xf32> to vector<16x32xf32>
      %15 = arith.addf %12, %14 : vector<16x32xf32>
      %c0_14 = arith.constant 0 : index
      %c0_15 = arith.constant 0 : index
      %16 = vector.load %arg6[%c0_14, %c0_15] : memref<16x32xf32, #tpu.memory_space<vmem>>, vector<16x32xf32>
      tpu.vector_store %arg6[%c0_14, %c0_15], %15 {strides = array<i32>} : memref<16x32xf32, #tpu.memory_space<vmem>>, vector<16x32xf32>,
    } else {
    }
    return
  }
  func.func @transform_0(%arg0: i32, %arg1: i32, %arg2: i32) -> (i32, i32) {
    %c0_i32 = arith.constant 0 : i32
    return %arg0, %arg2 : i32, i32
  }
  func.func @transform_1(%arg0: i32, %arg1: i32, %arg2: i32) -> (i32, i32) {
    %c0_i32 = arith.constant 0 : i32
    return %arg2, %arg1 : i32, i32
  }
  func.func @transform_2(%arg0: i32, %arg1: i32, %arg2: i32) -> (i32, i32) {
    %c0_i32 = arith.constant 0 : i32
    %c0_i32_0 = arith.constant 0 : i32
    return %c0_i32, %arg1 : i32, i32
  }
  func.func @transform_3(%arg0: i32, %arg1: i32, %arg2: i32) -> (i32, i32) {
    %c0_i32 = arith.constant 0 : i32
    return %arg0, %arg1 : i32, i32
  }
}

</mosaic_0001>

<llo_original>
// kernel: masked_attention_forward.3
$region0: #{masked_attention_forward.3}
  #allocation0 [shape = 'u32[]', space=smem, size = 0x4, offset = 0x4, fixed_abs, tag = 'smem constant byte address 0x4 - core index']
  #allocation1 [shape = 'u32[144,128]{1,0:T(1,128)}', space=vmem, size = 0x12000, scoped, tag = 'internal scratch']
  #allocation2 [shape = 'f32[16,96]{1,0:T(8,128)}', space=vmem, size = 0x2000, scoped, tag = 'scratch operand']
  %s0 = inlined_call_operand.vmem [shape: bf16[16,32], index: 0, kind: input, shape index: {}]
  %s1 = inlined_call_operand.vmem [shape: bf16[32,96], index: 1, kind: input, shape index: {}]
  %s2 = inlined_call_operand.vmem [shape: bf16[16,96], index: 2, kind: output, shape index: {}]
  %s3 = sld [smem:[#allocation0]]
  $region26: #{masked_attention_forward.3} parent=0
    _
  %s5 = ssub.s32 1, %s3
  %s6 = scalar_select 0, %s5, %s3
  // Predicated region
  $region2: #{masked_attention_forward.3} parent=0 // pred_check
    _
  $region3: #{masked_attention_forward.3} parent=0 // pred_check_branch
    %8 = sbr.rel (0) target = $region5
  $region4: #{masked_attention_forward.3} parent=0 // pred_region
    _
  $region5: #{masked_attention_forward.3} parent=0 // pred_fallthru
    _
  // Predicated region
  $region6: #{masked_attention_forward.3} parent=0 // pred_check
    _
  $region7: #{masked_attention_forward.3} parent=0 // pred_check_branch
    %10 = sbr.rel (0) target = $region9
  $region8: #{masked_attention_forward.3} parent=0 // pred_region
    _
  $region9: #{masked_attention_forward.3} parent=0 // pred_fallthru
    _
  %p12 = scmp.eq.s32.totalorder 0, 0
  // Predicated region
  $region10: #{masked_attention_forward.3} parent=0 // pred_check
    %p13 = pneg %p12
  $region11: #{masked_attention_forward.3} parent=0 // pred_check_branch
    %15 = sbr.rel (%p13) target = $region13
  $region12: #{masked_attention_forward.3} parent=0 // pred_region
    %vm16 = vcmask 785408
    %17 = vst.msk [vmem:[#allocation2] sm:$0xff] %vm16, 0.0
    %18 = vst.msk [vmem:[#allocation2 + $0x8] sm:$0xff] %vm16, 0.0
  $region13: #{masked_attention_forward.3} parent=0 // pred_fallthru
    _
  %v19 = vld [vmem:[#allocation2] sm:$0xff]
  %v20 = vld [vmem:[#allocation2 + $0x8] sm:$0xff]
  %v21 = vld [vmem:[%s0] sm:$0xf]
  %v22 = vld [vmem:[%s0 + $0x4] sm:$0xf]
  %v23 = vld [vmem:[%s1] sm:$0xf]
  %v24 = vld [vmem:[%s1 + $0x4] sm:$0xf]
  %v25 = vld [vmem:[%s1 + $0x8] sm:$0xf]
  %v26 = vld [vmem:[%s1 + $0xc] sm:$0xf]
  %v29 = vunpack.c.l.b16 %v21
  %v30 = vunpack.c.l.b16 %v22
  %v31 = vpack.c.b16 %v30, %v29
  %v36 = vunpack.c.l.b16 %v23
  %v37 = vunpack.c.l.b16 %v24
  %v38 = vunpack.c.l.b16 %v25
  %v39 = vunpack.c.l.b16 %v26
  %v40 = vpack.c.b16 %v37, %v36
  %v41 = vpack.c.b16 %v39, %v38
  %vm44 = vcmask 261120
  %v46 = vsel %vm44, %v31, 0
  %48 = vmatprep.subr.bf16.mxu0 0
  %49 = vmatpush1.bf16.msra.mxu0 0
  %50 = vmatprep.subr.bf16.mxu0 0
  %51 = vmatpush1.bf16.msra.mxu0 0
  %52 = vmatprep.subr.bf16.mxu0 0
  %53 = vmatpush1.bf16.msra.mxu0 0
  %54 = vmatprep.subr.bf16.mxu0 0
  %55 = vmatpush1.bf16.msra.mxu0 0
  %56 = vmatprep.subr.bf16.mxu0 0
  %57 = vmatpush1.bf16.msra.mxu0 0
  %58 = vmatprep.subr.bf16.mxu0 0
  %59 = vmatpush1.bf16.msra.mxu0 0
  %60 = vmatprep.subr.bf16.mxu0 0
  %61 = vmatpush1.bf16.msra.mxu0 %v41
  %62 = vmatprep.subr.bf16.mxu0 0
  %63 = vmatpush1.bf16.msra.mxu0 %v40
  %64 = vmatprep.subr.bf16.mxu0 0
  %65 = vmatpush2.bf16.msra.mxu0 0
  %66 = vmatprep.subr.bf16.mxu0 0
  %67 = vmatpush2.bf16.msra.mxu0 0
  %68 = vmatprep.subr.bf16.mxu0 0
  %69 = vmatpush2.bf16.msra.mxu0 0
  %70 = vmatprep.subr.bf16.mxu0 0
  %71 = vmatpush2.bf16.msra.mxu0 0
  %72 = vmatprep.subr.bf16.mxu0 0
  %73 = vmatpush2.bf16.msra.mxu0 0
  %74 = vmatprep.subr.bf16.mxu0 0
  %75 = vmatpush2.bf16.msra.mxu0 0
  %76 = vmatprep.subr.bf16.mxu0 0
  %77 = vmatpush2.bf16.msra.mxu0 0
  %78 = vmatprep.subr.bf16.mxu0 0
  %79 = vmatpush2.bf16.msra.mxu0 0
  %80 = vmatprep.mubr.bf16.mxu0 0
  %81 = vmatmul.mubr.bf16.gmra.mxu0 %v46
  %v82 = vpop.f32.mrf.mxu0
  %v83 = vadd.f32 0.0, %v82
  %v84 = vpop.f32.mrf.mxu0
  %v85 = vpop.f32.mrf.mxu0
  %v86 = vadd.f32 0.0, %v85
  %v87 = vpop.f32.mrf.mxu0
  %88 = vdwg.mxu0
  %v89 = vadd.f32 %v19, %v83
  %v90 = vadd.f32 %v20, %v86
  %vm91 = vcmask 785408
  %92 = vst.msk [vmem:[#allocation2] sm:$0xff] %vm91, %v89
  %93 = vst.msk [vmem:[#allocation2 + $0x8] sm:$0xff] %vm91, %v90
  // Predicated region
  $region14: #{masked_attention_forward.3} parent=0 // pred_check
    %p94 = pneg %p12
  $region15: #{masked_attention_forward.3} parent=0 // pred_check_branch
    %96 = sbr.rel (%p94) target = $region17
  $region16: #{masked_attention_forward.3} parent=0 // pred_region
    %v97 = vld [vmem:[#allocation2] sm:$0xff]
    %v98 = vld [vmem:[#allocation2 + $0x8] sm:$0xff]
    %v99 = vpack.c.bf16 %v98, %v97
    %v101 = vunpack.c.l.b16 %v99
    %v102 = vunpack.c.h.b16 %v99
    %v103 = vpack.c.b16 %v101, %v101
    %v104 = vpack.c.b16 %v102, %v102
    %vm107 = vcmask 781312
    %108 = vst.msk [vmem:[%s2] sm:$0xf] %vm107, %v103
    %109 = vst.msk [vmem:[%s2 + $0x4] sm:$0xf] %vm107, %v104
  $region17: #{masked_attention_forward.3} parent=0 // pred_fallthru
    _
  // Predicated region
  $region18: #{masked_attention_forward.3} parent=0 // pred_check
    _
  $region19: #{masked_attention_forward.3} parent=0 // pred_check_branch
    %111 = sbr.rel (0) target = $region21
  $region20: #{masked_attention_forward.3} parent=0 // pred_region
    _
  $region21: #{masked_attention_forward.3} parent=0 // pred_fallthru
    _
  // Predicated region
  $region22: #{masked_attention_forward.3} parent=0 // pred_check
    _
  $region23: #{masked_attention_forward.3} parent=0 // pred_check_branch
    %113 = sbr.rel (0) target = $region25
  $region24: #{masked_attention_forward.3} parent=0 // pred_region
    _
  $region25: #{masked_attention_forward.3} parent=0 // pred_fallthru
    _

// kernel: masked_attention_forward.5
$region0: #{masked_attention_forward.5}
  #allocation0 [shape = 'u32[]', space=smem, size = 0x4, offset = 0x4, fixed_abs, tag = 'smem constant byte address 0x4 - core index']
  #allocation1 [shape = 'u32[144,128]{1,0:T(1,128)}', space=vmem, size = 0x12000, scoped, tag = 'internal scratch']
  #allocation2 [shape = 'f32[16,32]{1,0:T(8,128)}', space=vmem, size = 0x2000, scoped, tag = 'scratch operand']
  %s0 = inlined_call_operand.vmem [shape: bf16[16,32], index: 0, kind: input, shape index: {}]
  %s1 = inlined_call_operand.vmem [shape: bf16[32,32], index: 1, kind: input, shape index: {}]
  %s2 = inlined_call_operand.vmem [shape: f32[1,32], index: 2, kind: input, shape index: {}]
  %s3 = inlined_call_operand.hbm [shape: f32[16,32], index: 3, kind: output, shape index: {}]
  %s4 = sld [smem:[#allocation0]]
  $region30: #{masked_attention_forward.5} parent=0
    _
  %s6 = ssub.s32 1, %s4
  %s7 = scalar_select 0, %s6, %s4
  $region1: #{masked_attention_forward.5} parent=0
    #allocation3 [shape = 'u8[8192]{0}', space=vmem, size = 0x2000, scoped, tag = 'output window, operand 0, single buffered']
    #allocation4 [shape = 's32[1]{0}', space=sflag, size = 0x4, scoped, tag = 'scoped memory for masked_attention_forward.5']
    %8 = vsyncpa [#allocation4], 0
    // Predicated region
    $region2: #{masked_attention_forward.5} parent=1 // pred_check
      _
    $region3: #{masked_attention_forward.5} parent=1 // pred_check_branch
      %10 = sbr.rel (0) target = $region5
    $region4: #{masked_attention_forward.5} parent=1 // pred_region
      _
    $region5: #{masked_attention_forward.5} parent=1 // pred_fallthru
      _
    // Predicated region
    $region6: #{masked_attention_forward.5} parent=1 // pred_check
      _
    $region7: #{masked_attention_forward.5} parent=1 // pred_check_branch
      %12 = sbr.rel (0) target = $region9
    $region8: #{masked_attention_forward.5} parent=1 // pred_region
      _
    $region9: #{masked_attention_forward.5} parent=1 // pred_fallthru
      _
    // Predicated region
    $region10: #{masked_attention_forward.5} parent=1 // pred_check
      _
    $region11: #{masked_attention_forward.5} parent=1 // pred_check_branch
      %14 = sbr.rel (0) target = $region13
    $region12: #{masked_attention_forward.5} parent=1 // pred_region
      _
    $region13: #{masked_attention_forward.5} parent=1 // pred_fallthru
      _
    %p16 = scmp.eq.s32.totalorder 0, 0
    // Predicated region
    $region14: #{masked_attention_forward.5} parent=1 // pred_check
      %p17 = pneg %p16
    $region15: #{masked_attention_forward.5} parent=1 // pred_check_branch
      %19 = sbr.rel (%p17) target = $region17
    $region16: #{masked_attention_forward.5} parent=1 // pred_region
      %vm20 = vcmask 261120
      %21 = vst.msk [vmem:[#allocation2] sm:$0xff] %vm20, 0.0
      %22 = vst.msk [vmem:[#allocation2 + $0x8] sm:$0xff] %vm20, 0.0
    $region17: #{masked_attention_forward.5} parent=1 // pred_fallthru
      _
    %v23 = vld [vmem:[#allocation2] sm:$0xff]
    %v24 = vld [vmem:[#allocation2 + $0x8] sm:$0xff]
    %v25 = vld [vmem:[%s0] sm:$0xf]
    %v26 = vld [vmem:[%s0 + $0x4] sm:$0xf]
    %v27 = vld [vmem:[%s1] sm:$0xf]
    %v28 = vld [vmem:[%s1 + $0x4] sm:$0xf]
    %v29 = vld [vmem:[%s1 + $0x8] sm:$0xf]
    %v30 = vld [vmem:[%s1 + $0xc] sm:$0xf]
    %v33 = vunpack.c.l.b16 %v25
    %v34 = vunpack.c.l.b16 %v26
    %v35 = vpack.c.b16 %v34, %v33
    %v40 = vunpack.c.l.b16 %v27
    %v41 = vunpack.c.l.b16 %v28
    %v42 = vunpack.c.l.b16 %v29
    %v43 = vunpack.c.l.b16 %v30
    %v44 = vpack.c.b16 %v41, %v40
    %v45 = vpack.c.b16 %v43, %v42
    %vm48 = vcmask 261120
    %v50 = vsel %vm48, %v35, 0
    %52 = vmatprep.subr.bf16.mxu0 0
    %53 = vmatpush1.bf16.msra.mxu0 0
    %54 = vmatprep.subr.bf16.mxu0 0
    %55 = vmatpush1.bf16.msra.mxu0 0
    %56 = vmatprep.subr.bf16.mxu0 0
    %57 = vmatpush1.bf16.msra.mxu0 0
    %58 = vmatprep.subr.bf16.mxu0 0
    %59 = vmatpush1.bf16.msra.mxu0 0
    %60 = vmatprep.subr.bf16.mxu0 0
    %61 = vmatpush1.bf16.msra.mxu0 0
    %62 = vmatprep.subr.bf16.mxu0 0
    %63 = vmatpush1.bf16.msra.mxu0 0
    %64 = vmatprep.subr.bf16.mxu0 0
    %65 = vmatpush1.bf16.msra.mxu0 %v45
    %66 = vmatprep.subr.bf16.mxu0 0
    %67 = vmatpush1.bf16.msra.mxu0 %v44
    %68 = vmatprep.subr.bf16.mxu0 0
    %69 = vmatpush2.bf16.msra.mxu0 0
    %70 = vmatprep.subr.bf16.mxu0 0
    %71 = vmatpush2.bf16.msra.mxu0 0
    %72 = vmatprep.subr.bf16.mxu0 0
    %73 = vmatpush2.bf16.msra.mxu0 0
    %74 = vmatprep.subr.bf16.mxu0 0
    %75 = vmatpush2.bf16.msra.mxu0 0
    %76 = vmatprep.subr.bf16.mxu0 0
    %77 = vmatpush2.bf16.msra.mxu0 0
    %78 = vmatprep.subr.bf16.mxu0 0
    %79 = vmatpush2.bf16.msra.mxu0 0
    %80 = vmatprep.subr.bf16.mxu0 0
    %81 = vmatpush2.bf16.msra.mxu0 0
    %82 = vmatprep.subr.bf16.mxu0 0
    %83 = vmatpush2.bf16.msra.mxu0 0
    %84 = vmatprep.mubr.bf16.mxu0 0
    %85 = vmatmul.mubr.bf16.gmra.mxu0 %v50
    %v86 = vpop.f32.mrf.mxu0
    %v87 = vadd.f32 0.0, %v86
    %v88 = vpop.f32.mrf.mxu0
    %v89 = vpop.f32.mrf.mxu0
    %v90 = vadd.f32 0.0, %v89
    %v91 = vpop.f32.mrf.mxu0
    %92 = vdwg.mxu0
    %v93 = vadd.f32 %v23, %v87
    %v94 = vadd.f32 %v24, %v90
    %95 = vst.msk [vmem:[#allocation2] sm:$0xff] %vm48, %v93
    %96 = vst.msk [vmem:[#allocation2 + $0x8] sm:$0xff] %vm48, %v94
    // Predicated region
    $region18: #{masked_attention_forward.5} parent=1 // pred_check
      %p97 = pneg %p16
    $region19: #{masked_attention_forward.5} parent=1 // pred_check_branch
      %99 = sbr.rel (%p97) target = $region21
    $region20: #{masked_attention_forward.5} parent=1 // pred_region
      %v100 = vld [vmem:[#allocation2] sm:$0xff]
      %v101 = vld [vmem:[#allocation2 + $0x8] sm:$0xff]
      %v102 = vld [vmem:[%s2] sm:$0x1]
      %v104 = vlaneseq
      %v105 = vshrl.u32 %v104, 7
      %v106 = vsub.s32 0, %v105
      %v107 = vrot.slane %v102, %v106
      %v109 = vadd.f32 %v100, %v107
      %v110 = vadd.f32 %v101, %v107
      %111 = vst.msk [vmem:[#allocation3] sm:$0xff] %vm48, %v109
      %112 = vst.msk [vmem:[#allocation3 + $0x8] sm:$0xff] %vm48, %v110
    $region21: #{masked_attention_forward.5} parent=1 // pred_fallthru
      _
    // Predicated region
    $region22: #{masked_attention_forward.5} parent=1 // pred_check
      _
    $region23: #{masked_attention_forward.5} parent=1 // pred_check_branch
      %114 = sbr.rel (0) target = $region25
    $region24: #{masked_attention_forward.5} parent=1 // pred_region
      %s116 = ssub.s32 256, 256
      %117 = vsyncadd [#allocation4], %s116
      %s118 = sshll.u32 [#allocation3], 4
      %s119 = int_to_ptr.vmem [resolvable:$true] %s118
      %124 = dma.vmem_to_hbm [thread:$0]  %s119, 256, %s3, [#allocation4], 128, 128, 8
    $region25: #{masked_attention_forward.5} parent=1 // pred_fallthru
      _
    // Predicated region
    $region26: #{masked_attention_forward.5} parent=1 // pred_check
      _
    $region27: #{masked_attention_forward.5} parent=1 // pred_check_branch
      %126 = sbr.rel (0) target = $region29
    $region28: #{masked_attention_forward.5} parent=1 // pred_region
      %127 = dma.done [#allocation4], 256
    $region29: #{masked_attention_forward.5} parent=1 // pred_fallthru
      _
    %128 = vsyncpa [#allocation4], 1

// kernel: masked_attention_forward.4
$region0: #{masked_attention_forward.4}
  #allocation0 [shape = 'u32[]', space=smem, size = 0x4, offset = 0x4, fixed_abs, tag = 'smem constant byte address 0x4 - core index']
  #allocation1 [shape = 'u32[144,128]{1,0:T(1,128)}', space=vmem, size = 0x12000, scoped, tag = 'internal scratch']
  %s0 = inlined_call_operand.vmem [shape: bf16[2,8,96], index: 0, kind: input, shape index: {}]
  %s1 = inlined_call_operand.vmem [shape: f32[2,8,1], index: 1, kind: input, shape index: {}]
  %s2 = inlined_call_operand.vmem [shape: f32[2,1,8], index: 2, kind: input, shape index: {}]
  %s3 = inlined_call_operand.vmem [shape: bf16[2,8,32], index: 3, kind: output, shape index: {}]
  %s4 = sld [smem:[#allocation0]]
  $region45: #{masked_attention_forward.4} parent=0
    _
  %s6 = ssub.s32 1, %s4
  %s7 = scalar_select 0, %s6, %s4
  loop: start=0, step=1, limit=4
  $region2: #{masked_attention_forward.4} parent=0 // loop_pre_header
    _
  $region3: #{masked_attention_forward.4} parent=0 // loop_header
    %s9 = sphi 0, %s13
    %p10 = scmp.ge.s32.totalorder %s9, 4
    %s19 = sphi 0, %s21
    %s22 = sphi 0, %s19
    %s23 = sphi 0, %s22
    %s39 = sphi 0, %s23
    %s45 = sphi 0, %s47
    %s48 = sphi 0, %s45
    %s49 = sphi 0, %s48
    %s65 = sphi 0, %s49
    %s71 = sphi 0, %s73
    %s74 = sphi 0, %s71
    %s75 = sphi 0, %s74
    %s91 = sphi 0, %s75
    %s97 = sphi 0, %s99
    %s100 = sphi 0, %s97
    %s101 = sphi 0, %s100
    %s117 = sphi 0, %s101
  $region4: #{masked_attention_forward.4} parent=0 // loop_header_branch
    %12 = sbr.rel (%p10) target = $region8
  $region5: #{masked_attention_forward.4} parent=0 // loop_body
    %s14 = ssub.s32 %s9, 1
    %s15 = ssub.s32 %s9, 2
    %s16 = sadd.s32 %s9, 1
    %s17 = ssub.s32 %s9, %s16
    %p18 = scmp.eq.s32.totalorder %s17, 0
    %s20 = sadd.s32 %s19, 1
    %s21 = scalar_select %p18, %s19, %s20
    %p24 = pneg %p18
    %p25 = scmp.eq.s32.totalorder %s9, 1
    %p26 = por %p24, %p25
    %p27 = scmp.ne.s32.totalorder %s19, %s22
    %p28 = scmp.eq.s32.totalorder %s9, 0
    %p29 = por %p27, %p28
    %p30 = scmp.ne.s32.totalorder %s19, %s22
    %p31 = scmp.eq.s32.totalorder %s14, 1
    %p32 = por %p30, %p31
    %p33 = scmp.ne.s32.totalorder %s22, %s23
    %p34 = scmp.eq.s32.totalorder %s14, 0
    %p35 = por %p33, %p34
    %p36 = scmp.ne.s32.totalorder %s22, %s23
    %p37 = scmp.eq.s32.totalorder %s15, 1
    %p38 = por %p36, %p37
    %p40 = scmp.ne.s32.totalorder %s23, %s39
    %p41 = scmp.eq.s32.totalorder %s15, 0
    %p42 = por %p40, %p41
    %s43 = ssub.s32 %s9, %s16
    %p44 = scmp.eq.s32.totalorder %s43, 0
    %s46 = sadd.s32 %s45, 1
    %s47 = scalar_select %p44, %s45, %s46
    %p50 = pneg %p44
    %p51 = scmp.eq.s32.totalorder %s9, 1
    %p52 = por %p50, %p51
    %p53 = scmp.ne.s32.totalorder %s45, %s48
    %p54 = scmp.eq.s32.totalorder %s9, 0
    %p55 = por %p53, %p54
    %p56 = scmp.ne.s32.totalorder %s45, %s48
    %p57 = scmp.eq.s32.totalorder %s14, 1
    %p58 = por %p56, %p57
    %p59 = scmp.ne.s32.totalorder %s48, %s49
    %p60 = scmp.eq.s32.totalorder %s14, 0
    %p61 = por %p59, %p60
    %p62 = scmp.ne.s32.totalorder %s48, %s49
    %p63 = scmp.eq.s32.totalorder %s15, 1
    %p64 = por %p62, %p63
    %p66 = scmp.ne.s32.totalorder %s49, %s65
    %p67 = scmp.eq.s32.totalorder %s15, 0
    %p68 = por %p66, %p67
    %s69 = ssub.s32 %s9, %s16
    %p70 = scmp.eq.s32.totalorder %s69, 0
    %s72 = sadd.s32 %s71, 1
    %s73 = scalar_select %p70, %s71, %s72
    %p76 = pneg %p70
    %p77 = scmp.eq.s32.totalorder %s9, 1
    %p78 = por %p76, %p77
    %p79 = scmp.ne.s32.totalorder %s71, %s74
    %p80 = scmp.eq.s32.totalorder %s9, 0
    %p81 = por %p79, %p80
    %p82 = scmp.ne.s32.totalorder %s71, %s74
    %p83 = scmp.eq.s32.totalorder %s14, 1
    %p84 = por %p82, %p83
    %p85 = scmp.ne.s32.totalorder %s74, %s75
    %p86 = scmp.eq.s32.totalorder %s14, 0
    %p87 = por %p85, %p86
    %p88 = scmp.ne.s32.totalorder %s74, %s75
    %p89 = scmp.eq.s32.totalorder %s15, 1
    %p90 = por %p88, %p89
    %p92 = scmp.ne.s32.totalorder %s75, %s91
    %p93 = scmp.eq.s32.totalorder %s15, 0
    %p94 = por %p92, %p93
    %s95 = ssub.s32 %s9, %s16
    %p96 = scmp.eq.s32.totalorder %s95, 0
    %s98 = sadd.s32 %s97, 1
    %s99 = scalar_select %p96, %s97, %s98
    %p102 = pneg %p96
    %p103 = scmp.eq.s32.totalorder %s9, 1
    %p104 = por %p102, %p103
    %p105 = scmp.ne.s32.totalorder %s97, %s100
    %p106 = scmp.eq.s32.totalorder %s9, 0
    %p107 = por %p105, %p106
    %p108 = scmp.ne.s32.totalorder %s97, %s100
    %p109 = scmp.eq.s32.totalorder %s14, 1
    %p110 = por %p108, %p109
    %p111 = scmp.ne.s32.totalorder %s100, %s101
    %p112 = scmp.eq.s32.totalorder %s14, 0
    %p113 = por %p111, %p112
    %p114 = scmp.ne.s32.totalorder %s100, %s101
    %p115 = scmp.eq.s32.totalorder %s15, 1
    %p116 = por %p114, %p115
    %p118 = scmp.ne.s32.totalorder %s101, %s117
    %p119 = scmp.eq.s32.totalorder %s15, 0
    %p120 = por %p118, %p119
    %p121 = scmp.le.s32.totalorder 1, %s9
    %p122 = scmp.lt.s32.totalorder %s9, 3
    %p123 = pnand %p121, %p122
    %p124 = pneg %p123
    // Predicated region
    $region9: #{masked_attention_forward.4} parent=5 // pred_check
      _
    $region10: #{masked_attention_forward.4} parent=5 // pred_check_branch
      %126 = sbr.rel (%p123) target = $region12
    $region11: #{masked_attention_forward.4} parent=5 // pred_region
      %s127 = ssub.s32 %s9, 1
    $region12: #{masked_attention_forward.4} parent=5 // pred_fallthru
      _
    %p128 = scmp.lt.s32.totalorder %s9, 2
    // Predicated region
    $region13: #{masked_attention_forward.4} parent=5 // pred_check
      %p129 = pneg %p128
    $region14: #{masked_attention_forward.4} parent=5 // pred_check_branch
      %131 = sbr.rel (%p129) target = $region16
    $region15: #{masked_attention_forward.4} parent=5 // pred_region
      // Predicated region
      $region17: #{masked_attention_forward.4} parent=15 // pred_check
        %p132 = pneg %p29
      $region18: #{masked_attention_forward.4} parent=15 // pred_check_branch
        %134 = sbr.rel (%p132) target = $region20
      $region19: #{masked_attention_forward.4} parent=15 // pred_region
        %p135 = scmp.lt.s32.totalorder %s9, 1
        %s136 = scalar_select %p135, %s9, 1
        %s137 = smul.addr %s136, 4
        %s138 = scalar_lea.vmem %s0, %s137
      $region20: #{masked_attention_forward.4} parent=15 // pred_fallthru
        _
      // Predicated region
      $region21: #{masked_attention_forward.4} parent=15 // pred_check
        %p139 = pneg %p55
      $region22: #{masked_attention_forward.4} parent=15 // pred_check_branch
        %141 = sbr.rel (%p139) target = $region24
      $region23: #{masked_attention_forward.4} parent=15 // pred_region
        %p142 = scmp.lt.s32.totalorder %s9, 1
        %s143 = scalar_select %p142, %s9, 1
        %s144 = smul.addr %s143, 8
        %s145 = scalar_lea.vmem %s1, %s144
      $region24: #{masked_attention_forward.4} parent=15 // pred_fallthru
        _
      // Predicated region
      $region25: #{masked_attention_forward.4} parent=15 // pred_check
        %p146 = pneg %p81
      $region26: #{masked_attention_forward.4} parent=15 // pred_check_branch
        %148 = sbr.rel (%p146) target = $region28
      $region27: #{masked_attention_forward.4} parent=15 // pred_region
        %p149 = scmp.lt.s32.totalorder %s9, 1
        %s150 = scalar_select %p149, %s9, 1
        %s151 = scalar_lea.vmem %s2, %s150
      $region28: #{masked_attention_forward.4} parent=15 // pred_fallthru
        _
    $region16: #{masked_attention_forward.4} parent=5 // pred_fallthru
      _
    %p152 = scmp.le.s32.totalorder 1, %s9
    %p153 = scmp.lt.s32.totalorder %s9, 3
    %p154 = pnand %p152, %p153
    %p155 = pneg %p154
    // Predicated region
    $region29: #{masked_attention_forward.4} parent=5 // pred_check
      _
    $region30: #{masked_attention_forward.4} parent=5 // pred_check_branch
      %157 = sbr.rel (%p154) target = $region32
    $region31: #{masked_attention_forward.4} parent=5 // pred_region
      %s158 = ssub.s32 %s9, 1
      %p159 = scmp.lt.s32.totalorder %s14, 1
      %s160 = scalar_select %p159, %s14, 1
      %s161 = smul.addr %s160, 4
      %s162 = scalar_lea.vmem %s0, %s161
      %p163 = pneg %p35
      %p164 = pneg %p32
      %p165 = scmp.lt.s32.totalorder %s14, 1
      %s166 = scalar_select %p165, %s14, 1
      %s167 = smul.addr %s166, 8
      %s168 = scalar_lea.vmem %s1, %s167
      %p169 = pneg %p61
      %p170 = pneg %p58
      %p171 = scmp.lt.s32.totalorder %s14, 1
      %s172 = scalar_select %p171, %s14, 1
      %s173 = scalar_lea.vmem %s2, %s172
      %p174 = pneg %p87
      %p175 = pneg %p84
      %p176 = pneg %p113
      %p177 = pneg %p110
      %p178 = scmp.lt.s32.totalorder %s14, 1
      %s179 = scalar_select %p178, %s14, 1
      %s180 = smul.addr %s179, 4
      %s181 = scalar_lea.vmem %s3, %s180
      %p182 = scmp.lt.s32.totalorder %s14, 1
      %s183 = scalar_select %p182, %s14, 1
      %s184 = smul.addr %s183, 4
      %s185 = scalar_lea.vmem %s0, %s184
      %p186 = scmp.lt.s32.totalorder %s14, 1
      %s187 = scalar_select %p186, %s14, 1
      %s188 = smul.addr %s187, 8
      %s189 = scalar_lea.vmem %s1, %s188
      %p190 = scmp.lt.s32.totalorder %s14, 1
      %s191 = scalar_select %p190, %s14, 1
      %s192 = scalar_lea.vmem %s2, %s191
      %p193 = scmp.lt.s32.totalorder %s14, 1
      %s194 = scalar_select %p193, %s14, 1
      %s195 = smul.addr %s194, 4
      %s196 = scalar_lea.vmem %s3, %s195
      %v198 = vld [vmem:[%s185] sm:$0xf]
      %v199 = vld [vmem:[%s189] sm:$0xff]
      %v200 = vld [vmem:[%s192] sm:$0x1]
      %vm201 = vcmp.gt.f32.partialorder %v200, 0.0
      %vm202 = vcmp.gt.f32.partialorder %v199, 0.0
      %v203 = vsel %vm202, 1, 0
      %204 = vset.pattern.permute.xlu0 0
      %205 = vperm.xlu0 %204, %v203
      %v206 = vpop.permute.xlu0 %205
      %vm207 = vcmp.eq.s32.totalorder %v206, 1
      %v208 = vsel %vm201, 1, 0
      %v209 = vlaneseq
      %v210 = vshrl.u32 %v209, 7
      %v211 = vsub.s32 0, %v210
      %v212 = vrot.slane %v208, %v211
      %vm213 = vcmp.eq.s32.totalorder %v212, 1
      %vm214 = vmand %vm207, %vm213
      %v215 = vunpack.c.l.bf16 %v198
      %v216 = vmul.f32 %v215, 0.5
      %v217 = vpack.c.bf16 %v216, %v216
      %v219 = vunpack.c.l.b16 %v198
      %v220 = vpack.c.b16 %v219, %v219
      %221 = vrot.lane.b32.xlu0 %v220, 96
      %v222 = vpop.permute.xlu0 %221
      %vm223 = vcmask 31744
      %v225 = vsel %vm223, %v217, 0
      %v228 = vsel %vm223, %v222, 0
      %230 = vmatprep.subr.bf16.mxu0 0
      %231 = vmatpush1.bf16.xpose.msra.mxu0 0
      %232 = vmatprep.subr.bf16.mxu0 0
      %233 = vmatpush1.bf16.xpose.msra.mxu0 0
      %234 = vmatprep.subr.bf16.mxu0 0
      %235 = vmatpush1.bf16.xpose.msra.mxu0 0
      %236 = vmatprep.subr.bf16.mxu0 0
      %237 = vmatpush1.bf16.xpose.msra.mxu0 0
      %238 = vmatprep.subr.bf16.mxu0 0
      %239 = vmatpush1.bf16.xpose.msra.mxu0 0
      %240 = vmatprep.subr.bf16.mxu0 0
      %241 = vmatpush1.bf16.xpose.msra.mxu0 0
      %242 = vmatprep.subr.bf16.mxu0 0
      %243 = vmatpush1.bf16.xpose.msra.mxu0 0
      %244 = vmatprep.subr.bf16.mxu0 0
      %245 = vmatpush1.bf16.xpose.msra.mxu0 %v228
      %246 = vmatprep.subr.bf16.mxu0 0
      %247 = vmatpush2.bf16.xpose.msra.mxu0 0
      %248 = vmatprep.subr.bf16.mxu0 0
      %249 = vmatpush2.bf16.xpose.msra.mxu0 0
      %250 = vmatprep.subr.bf16.mxu0 0
      %251 = vmatpush2.bf16.xpose.msra.mxu0 0
      %252 = vmatprep.subr.bf16.mxu0 0
      %253 = vmatpush2.bf16.xpose.msra.mxu0 0
      %254 = vmatprep.subr.bf16.mxu0 0
      %255 = vmatpush2.bf16.xpose.msra.mxu0 0
      %256 = vmatprep.subr.bf16.mxu0 0
      %257 = vmatpush2.bf16.xpose.msra.mxu0 0
      %258 = vmatprep.subr.bf16.mxu0 0
      %259 = vmatpush2.bf16.xpose.msra.mxu0 0
      %260 = vmatprep.subr.bf16.mxu0 0
      %261 = vmatpush2.bf16.xpose.msra.mxu0 0
      %262 = vmatprep.mubr.bf16.mxu0 0
      %263 = vmatmul.mubr.bf16.gmra.mxu0 %v225
      %v264 = vpop.f32.mrf.mxu0
      %v265 = vadd.f32 0.0, %v264
      %v266 = vpop.f32.mrf.mxu0
      %v267 = vpop.f32.mrf.mxu0
      %v268 = vpop.f32.mrf.mxu0
      %269 = vdwg.mxu0
      %v270 = vsel %vm214, %v265, -3.4028235e+38
      %vm271 = vcmask 64512
      %v272 = vsel %vm271, %v270, -inf
      %273 = vmax.xlane.f32.xlu0 %v272
      %v274 = vpop.xlane.xlu0 %273
      %v275 = vsub.f32 %v270, %v274
      %v276 = vmul.f32 %v275, 1.442695
      %v277 = vpow.pop %v276
      %v278 = vsel %vm271, %v277, 0.0
      %279 = vadd.xlane.f32.xlu0 %v278
      %v280 = vpop.xlane.xlu0 %279
      %v281 = vrcp.pop %v280
      %v282 = vmul.f32 %v277, %v281
      %v283 = vpack.c.bf16 %v282, %v282
      %284 = vrot.lane.b32.xlu0 %v220, 64
      %v285 = vpop.permute.xlu0 %284
      %v287 = vsel %vm271, %v283, 0
      %vm289 = vcmask 1043456
      %v291 = vsel %vm289, %v285, 0
      %293 = vmatprep.subr.bf16.mxu0 0
      %294 = vmatpush1.bf16.msra.mxu0 0
      %295 = vmatprep.subr.bf16.mxu0 0
      %296 = vmatpush1.bf16.msra.mxu0 0
      %297 = vmatprep.subr.bf16.mxu0 0
      %298 = vmatpush1.bf16.msra.mxu0 0
      %299 = vmatprep.subr.bf16.mxu0 0
      %300 = vmatpush1.bf16.msra.mxu0 0
      %301 = vmatprep.subr.bf16.mxu0 0
      %302 = vmatpush1.bf16.msra.mxu0 0
      %303 = vmatprep.subr.bf16.mxu0 0
      %304 = vmatpush1.bf16.msra.mxu0 0
      %305 = vmatprep.subr.bf16.mxu0 0
      %306 = vmatpush1.bf16.msra.mxu0 0
      %307 = vmatprep.subr.bf16.mxu0 0
      %308 = vmatpush1.bf16.msra.mxu0 %v291
      %309 = vmatprep.subr.bf16.mxu0 0
      %310 = vmatpush2.bf16.msra.mxu0 0
      %311 = vmatprep.subr.bf16.mxu0 0
      %312 = vmatpush2.bf16.msra.mxu0 0
      %313 = vmatprep.subr.bf16.mxu0 0
      %314 = vmatpush2.bf16.msra.mxu0 0
      %315 = vmatprep.subr.bf16.mxu0 0
      %316 = vmatpush2.bf16.msra.mxu0 0
      %317 = vmatprep.subr.bf16.mxu0 0
      %318 = vmatpush2.bf16.msra.mxu0 0
      %319 = vmatprep.subr.bf16.mxu0 0
      %320 = vmatpush2.bf16.msra.mxu0 0
      %321 = vmatprep.subr.bf16.mxu0 0
      %322 = vmatpush2.bf16.msra.mxu0 0
      %323 = vmatprep.subr.bf16.mxu0 0
      %324 = vmatpush2.bf16.msra.mxu0 0
      %325 = vmatprep.mubr.bf16.mxu0 0
      %326 = vmatmul.mubr.bf16.gmra.mxu0 %v287
      %v327 = vpop.f32.mrf.mxu0
      %v328 = vadd.f32 0.0, %v327
      %v329 = vpop.f32.mrf.mxu0
      %v330 = vpop.f32.mrf.mxu0
      %v331 = vpop.f32.mrf.mxu0
      %332 = vdwg.mxu0
      %v333 = vpack.c.bf16 %v328, %v328
      %vm334 = vcmask 27648
      %335 = vst.msk [vmem:[%s196] sm:$0xf] %vm334, %v333
      %337 = vrot.lane.b32.xlu0 %v217, 124
      %v338 = vpop.permute.xlu0 %337
      %339 = vrot.lane.b32.xlu0 %v220, 92
      %v340 = vpop.permute.xlu0 %339
      %v342 = vsel %vm223, %v338, 0
      %v345 = vsel %vm223, %v340, 0
      %347 = vmatprep.subr.bf16.mxu0 0
      %348 = vmatpush1.bf16.xpose.msra.mxu0 0
      %349 = vmatprep.subr.bf16.mxu0 0
      %350 = vmatpush1.bf16.xpose.msra.mxu0 0
      %351 = vmatprep.subr.bf16.mxu0 0
      %352 = vmatpush1.bf16.xpose.msra.mxu0 0
      %353 = vmatprep.subr.bf16.mxu0 0
      %354 = vmatpush1.bf16.xpose.msra.mxu0 0
      %355 = vmatprep.subr.bf16.mxu0 0
      %356 = vmatpush1.bf16.xpose.msra.mxu0 0
      %357 = vmatprep.subr.bf16.mxu0 0
      %358 = vmatpush1.bf16.xpose.msra.mxu0 0
      %359 = vmatprep.subr.bf16.mxu0 0
      %360 = vmatpush1.bf16.xpose.msra.mxu0 0
      %361 = vmatprep.subr.bf16.mxu0 0
      %362 = vmatpush1.bf16.xpose.msra.mxu0 %v345
      %363 = vmatprep.subr.bf16.mxu0 0
      %364 = vmatpush2.bf16.xpose.msra.mxu0 0
      %365 = vmatprep.subr.bf16.mxu0 0
      %366 = vmatpush2.bf16.xpose.msra.mxu0 0
      %367 = vmatprep.subr.bf16.mxu0 0
      %368 = vmatpush2.bf16.xpose.msra.mxu0 0
      %369 = vmatprep.subr.bf16.mxu0 0
      %370 = vmatpush2.bf16.xpose.msra.mxu0 0
      %371 = vmatprep.subr.bf16.mxu0 0
      %372 = vmatpush2.bf16.xpose.msra.mxu0 0
      %373 = vmatprep.subr.bf16.mxu0 0
      %374 = vmatpush2.bf16.xpose.msra.mxu0 0
      %375 = vmatprep.subr.bf16.mxu0 0
      %376 = vmatpush2.bf16.xpose.msra.mxu0 0
      %377 = vmatprep.subr.bf16.mxu0 0
      %378 = vmatpush2.bf16.xpose.msra.mxu0 0
      %379 = vmatprep.mubr.bf16.mxu0 0
      %380 = vmatmul.mubr.bf16.gmra.mxu0 %v342
      %v381 = vpop.f32.mrf.mxu0
      %v382 = vadd.f32 0.0, %v381
      %v383 = vpop.f32.mrf.mxu0
      %v384 = vpop.f32.mrf.mxu0
      %v385 = vpop.f32.mrf.mxu0
      %386 = vdwg.mxu0
      %v387 = vsel %vm214, %v382, -3.4028235e+38
      %v388 = vsel %vm271, %v387, -inf
      %389 = vmax.xlane.f32.xlu0 %v388
      %v390 = vpop.xlane.xlu0 %389
      %v391 = vsub.f32 %v387, %v390
      %v392 = vmul.f32 %v391, 1.442695
      %v393 = vpow.pop %v392
      %v394 = vsel %vm271, %v393, 0.0
      %395 = vadd.xlane.f32.xlu0 %v394
      %v396 = vpop.xlane.xlu0 %395
      %v397 = vrcp.pop %v396
      %v398 = vmul.f32 %v393, %v397
      %v399 = vpack.c.bf16 %v398, %v398
      %400 = vrot.lane.b32.xlu0 %v220, 60
      %v401 = vpop.permute.xlu0 %400
      %v403 = vsel %vm271, %v399, 0
      %v406 = vsel %vm289, %v401, 0
      %408 = vmatprep.subr.bf16.mxu0 0
      %409 = vmatpush1.bf16.msra.mxu0 0
      %410 = vmatprep.subr.bf16.mxu0 0
      %411 = vmatpush1.bf16.msra.mxu0 0
      %412 = vmatprep.subr.bf16.mxu0 0
      %413 = vmatpush1.bf16.msra.mxu0 0
      %414 = vmatprep.subr.bf16.mxu0 0
      %415 = vmatpush1.bf16.msra.mxu0 0
      %416 = vmatprep.subr.bf16.mxu0 0
      %417 = vmatpush1.bf16.msra.mxu0 0
      %418 = vmatprep.subr.bf16.mxu0 0
      %419 = vmatpush1.bf16.msra.mxu0 0
      %420 = vmatprep.subr.bf16.mxu0 0
      %421 = vmatpush1.bf16.msra.mxu0 0
      %422 = vmatprep.subr.bf16.mxu0 0
      %423 = vmatpush1.bf16.msra.mxu0 %v406
      %424 = vmatprep.subr.bf16.mxu0 0
      %425 = vmatpush2.bf16.msra.mxu0 0
      %426 = vmatprep.subr.bf16.mxu0 0
      %427 = vmatpush2.bf16.msra.mxu0 0
      %428 = vmatprep.subr.bf16.mxu0 0
      %429 = vmatpush2.bf16.msra.mxu0 0
      %430 = vmatprep.subr.bf16.mxu0 0
      %431 = vmatpush2.bf16.msra.mxu0 0
      %432 = vmatprep.subr.bf16.mxu0 0
      %433 = vmatpush2.bf16.msra.mxu0 0
      %434 = vmatprep.subr.bf16.mxu0 0
      %435 = vmatpush2.bf16.msra.mxu0 0
      %436 = vmatprep.subr.bf16.mxu0 0
      %437 = vmatpush2.bf16.msra.mxu0 0
      %438 = vmatprep.subr.bf16.mxu0 0
      %439 = vmatpush2.bf16.msra.mxu0 0
      %440 = vmatprep.mubr.bf16.mxu0 0
      %441 = vmatmul.mubr.bf16.gmra.mxu0 %v403
      %v442 = vpop.f32.mrf.mxu0
      %v443 = vadd.f32 0.0, %v442
      %v444 = vpop.f32.mrf.mxu0
      %v445 = vpop.f32.mrf.mxu0
      %v446 = vpop.f32.mrf.mxu0
      %447 = vdwg.mxu0
      %v448 = vpack.c.bf16 %v443, %v443
      %v450 = vunpack.c.l.b16 %v448
      %v451 = vpack.c.b16 %v450, %v450
      %452 = vrot.lane.b32.xlu0 %v451, 4
      %v453 = vpop.permute.xlu0 %452
      %vm455 = vcmask 60448
      %456 = vst.msk [vmem:[%s196] sm:$0xf] %vm455, %v453
      %457 = vrot.lane.b32.xlu0 %v217, 120
      %v458 = vpop.permute.xlu0 %457
      %459 = vrot.lane.b32.xlu0 %v220, 88
      %v460 = vpop.permute.xlu0 %459
      %v462 = vsel %vm223, %v458, 0
      %v465 = vsel %vm223, %v460, 0
      %467 = vmatprep.subr.bf16.mxu0 0
      %468 = vmatpush1.bf16.xpose.msra.mxu0 0
      %469 = vmatprep.subr.bf16.mxu0 0
      %470 = vmatpush1.bf16.xpose.msra.mxu0 0
      %471 = vmatprep.subr.bf16.mxu0 0
      %472 = vmatpush1.bf16.xpose.msra.mxu0 0
      %473 = vmatprep.subr.bf16.mxu0 0
      %474 = vmatpush1.bf16.xpose.msra.mxu0 0
      %475 = vmatprep.subr.bf16.mxu0 0
      %476 = vmatpush1.bf16.xpose.msra.mxu0 0
      %477 = vmatprep.subr.bf16.mxu0 0
      %478 = vmatpush1.bf16.xpose.msra.mxu0 0
      %479 = vmatprep.subr.bf16.mxu0 0
      %480 = vmatpush1.bf16.xpose.msra.mxu0 0
      %481 = vmatprep.subr.bf16.mxu0 0
      %482 = vmatpush1.bf16.xpose.msra.mxu0 %v465
      %483 = vmatprep.subr.bf16.mxu0 0
      %484 = vmatpush2.bf16.xpose.msra.mxu0 0
      %485 = vmatprep.subr.bf16.mxu0 0
      %486 = vmatpush2.bf16.xpose.msra.mxu0 0
      %487 = vmatprep.subr.bf16.mxu0 0
      %488 = vmatpush2.bf16.xpose.msra.mxu0 0
      %489 = vmatprep.subr.bf16.mxu0 0
      %490 = vmatpush2.bf16.xpose.msra.mxu0 0
      %491 = vmatprep.subr.bf16.mxu0 0
      %492 = vmatpush2.bf16.xpose.msra.mxu0 0
      %493 = vmatprep.subr.bf16.mxu0 0
      %494 = vmatpush2.bf16.xpose.msra.mxu0 0
      %495 = vmatprep.subr.bf16.mxu0 0
      %496 = vmatpush2.bf16.xpose.msra.mxu0 0
      %497 = vmatprep.subr.bf16.mxu0 0
      %498 = vmatpush2.bf16.xpose.msra.mxu0 0
      %499 = vmatprep.mubr.bf16.mxu0 0
      %500 = vmatmul.mubr.bf16.gmra.mxu0 %v462
      %v501 = vpop.f32.mrf.mxu0
      %v502 = vadd.f32 0.0, %v501
      %v503 = vpop.f32.mrf.mxu0
      %v504 = vpop.f32.mrf.mxu0
      %v505 = vpop.f32.mrf.mxu0
      %506 = vdwg.mxu0
      %v507 = vsel %vm214, %v502, -3.4028235e+38
      %v508 = vsel %vm271, %v507, -inf
      %509 = vmax.xlane.f32.xlu0 %v508
      %v510 = vpop.xlane.xlu0 %509
      %v511 = vsub.f32 %v507, %v510
      %v512 = vmul.f32 %v511, 1.442695
      %v513 = vpow.pop %v512
      %v514 = vsel %vm271, %v513, 0.0
      %515 = vadd.xlane.f32.xlu0 %v514
      %v516 = vpop.xlane.xlu0 %515
      %v517 = vrcp.pop %v516
      %v518 = vmul.f32 %v513, %v517
      %v519 = vpack.c.bf16 %v518, %v518
      %520 = vrot.lane.b32.xlu0 %v220, 56
      %v521 = vpop.permute.xlu0 %520
      %v523 = vsel %vm271, %v519, 0
      %v526 = vsel %vm289, %v521, 0
      %528 = vmatprep.subr.bf16.mxu0 0
      %529 = vmatpush1.bf16.msra.mxu0 0
      %530 = vmatprep.subr.bf16.mxu0 0
      %531 = vmatpush1.bf16.msra.mxu0 0
      %532 = vmatprep.subr.bf16.mxu0 0
      %533 = vmatpush1.bf16.msra.mxu0 0
      %534 = vmatprep.subr.bf16.mxu0 0
      %535 = vmatpush1.bf16.msra.mxu0 0
      %536 = vmatprep.subr.bf16.mxu0 0
      %537 = vmatpush1.bf16.msra.mxu0 0
      %538 = vmatprep.subr.bf16.mxu0 0
      %539 = vmatpush1.bf16.msra.mxu0 0
      %540 = vmatprep.subr.bf16.mxu0 0
      %541 = vmatpush1.bf16.msra.mxu0 0
      %542 = vmatprep.subr.bf16.mxu0 0
      %543 = vmatpush1.bf16.msra.mxu0 %v526
      %544 = vmatprep.subr.bf16.mxu0 0
      %545 = vmatpush2.bf16.msra.mxu0 0
      %546 = vmatprep.subr.bf16.mxu0 0
      %547 = vmatpush2.bf16.msra.mxu0 0
      %548 = vmatprep.subr.bf16.mxu0 0
      %549 = vmatpush2.bf16.msra.mxu0 0
      %550 = vmatprep.subr.bf16.mxu0 0
      %551 = vmatpush2.bf16.msra.mxu0 0
      %552 = vmatprep.subr.bf16.mxu0 0
      %553 = vmatpush2.bf16.msra.mxu0 0
      %554 = vmatprep.subr.bf16.mxu0 0
      %555 = vmatpush2.bf16.msra.mxu0 0
      %556 = vmatprep.subr.bf16.mxu0 0
      %557 = vmatpush2.bf16.msra.mxu0 0
      %558 = vmatprep.subr.bf16.mxu0 0
      %559 = vmatpush2.bf16.msra.mxu0 0
      %560 = vmatprep.mubr.bf16.mxu0 0
      %561 = vmatmul.mubr.bf16.gmra.mxu0 %v523
      %v562 = vpop.f32.mrf.mxu0
      %v563 = vadd.f32 0.0, %v562
      %v564 = vpop.f32.mrf.mxu0
      %v565 = vpop.f32.mrf.mxu0
      %v566 = vpop.f32.mrf.mxu0
      %567 = vdwg.mxu0
      %v568 = vpack.c.bf16 %v563, %v563
      %v570 = vunpack.c.l.b16 %v568
      %v571 = vpack.c.b16 %v570, %v570
      %572 = vrot.lane.b32.xlu0 %v571, 8
      %v573 = vpop.permute.xlu0 %572
      %vm575 = vcmask 93248
      %576 = vst.msk [vmem:[%s196] sm:$0xf] %vm575, %v573
      %577 = vrot.lane.b32.xlu0 %v217, 116
      %v578 = vpop.permute.xlu0 %577
      %579 = vrot.lane.b32.xlu0 %v220, 84
      %v580 = vpop.permute.xlu0 %579
      %v582 = vsel %vm223, %v578, 0
      %v585 = vsel %vm223, %v580, 0
      %587 = vmatprep.subr.bf16.mxu0 0
      %588 = vmatpush1.bf16.xpose.msra.mxu0 0
      %589 = vmatprep.subr.bf16.mxu0 0
      %590 = vmatpush1.bf16.xpose.msra.mxu0 0
      %591 = vmatprep.subr.bf16.mxu0 0
      %592 = vmatpush1.bf16.xpose.msra.mxu0 0
      %593 = vmatprep.subr.bf16.mxu0 0
      %594 = vmatpush1.bf16.xpose.msra.mxu0 0
      %595 = vmatprep.subr.bf16.mxu0 0
      %596 = vmatpush1.bf16.xpose.msra.mxu0 0
      %597 = vmatprep.subr.bf16.mxu0 0
      %598 = vmatpush1.bf16.xpose.msra.mxu0 0
      %599 = vmatprep.subr.bf16.mxu0 0
      %600 = vmatpush1.bf16.xpose.msra.mxu0 0
      %601 = vmatprep.subr.bf16.mxu0 0
      %602 = vmatpush1.bf16.xpose.msra.mxu0 %v585
      %603 = vmatprep.subr.bf16.mxu0 0
      %604 = vmatpush2.bf16.xpose.msra.mxu0 0
      %605 = vmatprep.subr.bf16.mxu0 0
      %606 = vmatpush2.bf16.xpose.msra.mxu0 0
      %607 = vmatprep.subr.bf16.mxu0 0
      %608 = vmatpush2.bf16.xpose.msra.mxu0 0
      %609 = vmatprep.subr.bf16.mxu0 0
      %610 = vmatpush2.bf16.xpose.msra.mxu0 0
      %611 = vmatprep.subr.bf16.mxu0 0
      %612 = vmatpush2.bf16.xpose.msra.mxu0 0
      %613 = vmatprep.subr.bf16.mxu0 0
      %614 = vmatpush2.bf16.xpose.msra.mxu0 0
      %615 = vmatprep.subr.bf16.mxu0 0
      %616 = vmatpush2.bf16.xpose.msra.mxu0 0
      %617 = vmatprep.subr.bf16.mxu0 0
      %618 = vmatpush2.bf16.xpose.msra.mxu0 0
      %619 = vmatprep.mubr.bf16.mxu0 0
      %620 = vmatmul.mubr.bf16.gmra.mxu0 %v582
      %v621 = vpop.f32.mrf.mxu0
      %v622 = vadd.f32 0.0, %v621
      %v623 = vpop.f32.mrf.mxu0
      %v624 = vpop.f32.mrf.mxu0
      %v625 = vpop.f32.mrf.mxu0
      %626 = vdwg.mxu0
      %v627 = vsel %vm214, %v622, -3.4028235e+38
      %v628 = vsel %vm271, %v627, -inf
      %629 = vmax.xlane.f32.xlu0 %v628
      %v630 = vpop.xlane.xlu0 %629
      %v631 = vsub.f32 %v627, %v630
      %v632 = vmul.f32 %v631, 1.442695
      %v633 = vpow.pop %v632
      %v634 = vsel %vm271, %v633, 0.0
      %635 = vadd.xlane.f32.xlu0 %v634
      %v636 = vpop.xlane.xlu0 %635
      %v637 = vrcp.pop %v636
      %v638 = vmul.f32 %v633, %v637
      %v639 = vpack.c.bf16 %v638, %v638
      %640 = vrot.lane.b32.xlu0 %v220, 52
      %v641 = vpop.permute.xlu0 %640
      %v643 = vsel %vm271, %v639, 0
      %v646 = vsel %vm289, %v641, 0
      %648 = vmatprep.subr.bf16.mxu0 0
      %649 = vmatpush1.bf16.msra.mxu0 0
      %650 = vmatprep.subr.bf16.mxu0 0
      %651 = vmatpush1.bf16.msra.mxu0 0
      %652 = vmatprep.subr.bf16.mxu0 0
      %653 = vmatpush1.bf16.msra.mxu0 0
      %654 = vmatprep.subr.bf16.mxu0 0
      %655 = vmatpush1.bf16.msra.mxu0 0
      %656 = vmatprep.subr.bf16.mxu0 0
      %657 = vmatpush1.bf16.msra.mxu0 0
      %658 = vmatprep.subr.bf16.mxu0 0
      %659 = vmatpush1.bf16.msra.mxu0 0
      %660 = vmatprep.subr.bf16.mxu0 0
      %661 = vmatpush1.bf16.msra.mxu0 0
      %662 = vmatprep.subr.bf16.mxu0 0
      %663 = vmatpush1.bf16.msra.mxu0 %v646
      %664 = vmatprep.subr.bf16.mxu0 0
      %665 = vmatpush2.bf16.msra.mxu0 0
      %666 = vmatprep.subr.bf16.mxu0 0
      %667 = vmatpush2.bf16.msra.mxu0 0
      %668 = vmatprep.subr.bf16.mxu0 0
      %669 = vmatpush2.bf16.msra.mxu0 0
      %670 = vmatprep.subr.bf16.mxu0 0
      %671 = vmatpush2.bf16.msra.mxu0 0
      %672 = vmatprep.subr.bf16.mxu0 0
      %673 = vmatpush2.bf16.msra.mxu0 0
      %674 = vmatprep.subr.bf16.mxu0 0
      %675 = vmatpush2.bf16.msra.mxu0 0
      %676 = vmatprep.subr.bf16.mxu0 0
      %677 = vmatpush2.bf16.msra.mxu0 0
      %678 = vmatprep.subr.bf16.mxu0 0
      %679 = vmatpush2.bf16.msra.mxu0 0
      %680 = vmatprep.mubr.bf16.mxu0 0
      %681 = vmatmul.mubr.bf16.gmra.mxu0 %v643
      %v682 = vpop.f32.mrf.mxu0
      %v683 = vadd.f32 0.0, %v682
      %v684 = vpop.f32.mrf.mxu0
      %v685 = vpop.f32.mrf.mxu0
      %v686 = vpop.f32.mrf.mxu0
      %687 = vdwg.mxu0
      %v688 = vpack.c.bf16 %v683, %v683
      %v690 = vunpack.c.l.b16 %v688
      %v691 = vpack.c.b16 %v690, %v690
      %692 = vrot.lane.b32.xlu0 %v691, 12
      %v693 = vpop.permute.xlu0 %692
      %vm695 = vcmask 126048
      %696 = vst.msk [vmem:[%s196] sm:$0xf] %vm695, %v693
      %697 = vrot.lane.b32.xlu0 %v217, 112
      %v698 = vpop.permute.xlu0 %697
      %699 = vrot.lane.b32.xlu0 %v220, 80
      %v700 = vpop.permute.xlu0 %699
      %v702 = vsel %vm223, %v698, 0
      %v705 = vsel %vm223, %v700, 0
      %707 = vmatprep.subr.bf16.mxu0 0
      %708 = vmatpush1.bf16.xpose.msra.mxu0 0
      %709 = vmatprep.subr.bf16.mxu0 0
      %710 = vmatpush1.bf16.xpose.msra.mxu0 0
      %711 = vmatprep.subr.bf16.mxu0 0
      %712 = vmatpush1.bf16.xpose.msra.mxu0 0
      %713 = vmatprep.subr.bf16.mxu0 0
      %714 = vmatpush1.bf16.xpose.msra.mxu0 0
      %715 = vmatprep.subr.bf16.mxu0 0
      %716 = vmatpush1.bf16.xpose.msra.mxu0 0
      %717 = vmatprep.subr.bf16.mxu0 0
      %718 = vmatpush1.bf16.xpose.msra.mxu0 0
      %719 = vmatprep.subr.bf16.mxu0 0
      %720 = vmatpush1.bf16.xpose.msra.mxu0 0
      %721 = vmatprep.subr.bf16.mxu0 0
      %722 = vmatpush1.bf16.xpose.msra.mxu0 %v705
      %723 = vmatprep.subr.bf16.mxu0 0
      %724 = vmatpush2.bf16.xpose.msra.mxu0 0
      %725 = vmatprep.subr.bf16.mxu0 0
      %726 = vmatpush2.bf16.xpose.msra.mxu0 0
      %727 = vmatprep.subr.bf16.mxu0 0
      %728 = vmatpush2.bf16.xpose.msra.mxu0 0
      %729 = vmatprep.subr.bf16.mxu0 0
      %730 = vmatpush2.bf16.xpose.msra.mxu0 0
      %731 = vmatprep.subr.bf16.mxu0 0
      %732 = vmatpush2.bf16.xpose.msra.mxu0 0
      %733 = vmatprep.subr.bf16.mxu0 0
      %734 = vmatpush2.bf16.xpose.msra.mxu0 0
      %735 = vmatprep.subr.bf16.mxu0 0
      %736 = vmatpush2.bf16.xpose.msra.mxu0 0
      %737 = vmatprep.subr.bf16.mxu0 0
      %738 = vmatpush2.bf16.xpose.msra.mxu0 0
      %739 = vmatprep.mubr.bf16.mxu0 0
      %740 = vmatmul.mubr.bf16.gmra.mxu0 %v702
      %v741 = vpop.f32.mrf.mxu0
      %v742 = vadd.f32 0.0, %v741
      %v743 = vpop.f32.mrf.mxu0
      %v744 = vpop.f32.mrf.mxu0
      %v745 = vpop.f32.mrf.mxu0
      %746 = vdwg.mxu0
      %v747 = vsel %vm214, %v742, -3.4028235e+38
      %v748 = vsel %vm271, %v747, -inf
      %749 = vmax.xlane.f32.xlu0 %v748
      %v750 = vpop.xlane.xlu0 %749
      %v751 = vsub.f32 %v747, %v750
      %v752 = vmul.f32 %v751, 1.442695
      %v753 = vpow.pop %v752
      %v754 = vsel %vm271, %v753, 0.0
      %755 = vadd.xlane.f32.xlu0 %v754
      %v756 = vpop.xlane.xlu0 %755
      %v757 = vrcp.pop %v756
      %v758 = vmul.f32 %v753, %v757
      %v759 = vpack.c.bf16 %v758, %v758
      %760 = vrot.lane.b32.xlu0 %v220, 48
      %v761 = vpop.permute.xlu0 %760
      %v763 = vsel %vm271, %v759, 0
      %v766 = vsel %vm289, %v761, 0
      %768 = vmatprep.subr.bf16.mxu0 0
      %769 = vmatpush1.bf16.msra.mxu0 0
      %770 = vmatprep.subr.bf16.mxu0 0
      %771 = vmatpush1.bf16.msra.mxu0 0
      %772 = vmatprep.subr.bf16.mxu0 0
      %773 = vmatpush1.bf16.msra.mxu0 0
      %774 = vmatprep.subr.bf16.mxu0 0
      %775 = vmatpush1.bf16.msra.mxu0 0
      %776 = vmatprep.subr.bf16.mxu0 0
      %777 = vmatpush1.bf16.msra.mxu0 0
      %778 = vmatprep.subr.bf16.mxu0 0
      %779 = vmatpush1.bf16.msra.mxu0 0
      %780 = vmatprep.subr.bf16.mxu0 0
      %781 = vmatpush1.bf16.msra.mxu0 0
      %782 = vmatprep.subr.bf16.mxu0 0
      %783 = vmatpush1.bf16.msra.mxu0 %v766
      %784 = vmatprep.subr.bf16.mxu0 0
      %785 = vmatpush2.bf16.msra.mxu0 0
      %786 = vmatprep.subr.bf16.mxu0 0
      %787 = vmatpush2.bf16.msra.mxu0 0
      %788 = vmatprep.subr.bf16.mxu0 0
      %789 = vmatpush2.bf16.msra.mxu0 0
      %790 = vmatprep.subr.bf16.mxu0 0
      %791 = vmatpush2.bf16.msra.mxu0 0
      %792 = vmatprep.subr.bf16.mxu0 0
      %793 = vmatpush2.bf16.msra.mxu0 0
      %794 = vmatprep.subr.bf16.mxu0 0
      %795 = vmatpush2.bf16.msra.mxu0 0
      %796 = vmatprep.subr.bf16.mxu0 0
      %797 = vmatpush2.bf16.msra.mxu0 0
      %798 = vmatprep.subr.bf16.mxu0 0
      %799 = vmatpush2.bf16.msra.mxu0 0
      %800 = vmatprep.mubr.bf16.mxu0 0
      %801 = vmatmul.mubr.bf16.gmra.mxu0 %v763
      %v802 = vpop.f32.mrf.mxu0
      %v803 = vadd.f32 0.0, %v802
      %v804 = vpop.f32.mrf.mxu0
      %v805 = vpop.f32.mrf.mxu0
      %v806 = vpop.f32.mrf.mxu0
      %807 = vdwg.mxu0
      %v808 = vpack.c.bf16 %v803, %v803
      %v810 = vunpack.c.l.b16 %v808
      %v811 = vpack.c.b16 %v810, %v810
      %812 = vrot.lane.b32.xlu0 %v811, 16
      %v813 = vpop.permute.xlu0 %812
      %vm815 = vcmask 158848
      %816 = vst.msk [vmem:[%s196] sm:$0xf] %vm815, %v813
      %817 = vrot.lane.b32.xlu0 %v217, 108
      %v818 = vpop.permute.xlu0 %817
      %819 = vrot.lane.b32.xlu0 %v220, 76
      %v820 = vpop.permute.xlu0 %819
      %v822 = vsel %vm223, %v818, 0
      %v825 = vsel %vm223, %v820, 0
      %827 = vmatprep.subr.bf16.mxu0 0
      %828 = vmatpush1.bf16.xpose.msra.mxu0 0
      %829 = vmatprep.subr.bf16.mxu0 0
      %830 = vmatpush1.bf16.xpose.msra.mxu0 0
      %831 = vmatprep.subr.bf16.mxu0 0
      %832 = vmatpush1.bf16.xpose.msra.mxu0 0
      %833 = vmatprep.subr.bf16.mxu0 0
      %834 = vmatpush1.bf16.xpose.msra.mxu0 0
      %835 = vmatprep.subr.bf16.mxu0 0
      %836 = vmatpush1.bf16.xpose.msra.mxu0 0
      %837 = vmatprep.subr.bf16.mxu0 0
      %838 = vmatpush1.bf16.xpose.msra.mxu0 0
      %839 = vmatprep.subr.bf16.mxu0 0
      %840 = vmatpush1.bf16.xpose.msra.mxu0 0
      %841 = vmatprep.subr.bf16.mxu0 0
      %842 = vmatpush1.bf16.xpose.msra.mxu0 %v825
      %843 = vmatprep.subr.bf16.mxu0 0
      %844 = vmatpush2.bf16.xpose.msra.mxu0 0
      %845 = vmatprep.subr.bf16.mxu0 0
      %846 = vmatpush2.bf16.xpose.msra.mxu0 0
      %847 = vmatprep.subr.bf16.mxu0 0
      %848 = vmatpush2.bf16.xpose.msra.mxu0 0
      %849 = vmatprep.subr.bf16.mxu0 0
      %850 = vmatpush2.bf16.xpose.msra.mxu0 0
      %851 = vmatprep.subr.bf16.mxu0 0
      %852 = vmatpush2.bf16.xpose.msra.mxu0 0
      %853 = vmatprep.subr.bf16.mxu0 0
      %854 = vmatpush2.bf16.xpose.msra.mxu0 0
      %855 = vmatprep.subr.bf16.mxu0 0
      %856 = vmatpush2.bf16.xpose.msra.mxu0 0
      %857 = vmatprep.subr.bf16.mxu0 0
      %858 = vmatpush2.bf16.xpose.msra.mxu0 0
      %859 = vmatprep.mubr.bf16.mxu0 0
      %860 = vmatmul.mubr.bf16.gmra.mxu0 %v822
      %v861 = vpop.f32.mrf.mxu0
      %v862 = vadd.f32 0.0, %v861
      %v863 = vpop.f32.mrf.mxu0
      %v864 = vpop.f32.mrf.mxu0
      %v865 = vpop.f32.mrf.mxu0
      %866 = vdwg.mxu0
      %v867 = vsel %vm214, %v862, -3.4028235e+38
      %v868 = vsel %vm271, %v867, -inf
      %869 = vmax.xlane.f32.xlu0 %v868
      %v870 = vpop.xlane.xlu0 %869
      %v871 = vsub.f32 %v867, %v870
      %v872 = vmul.f32 %v871, 1.442695
      %v873 = vpow.pop %v872
      %v874 = vsel %vm271, %v873, 0.0
      %875 = vadd.xlane.f32.xlu0 %v874
      %v876 = vpop.xlane.xlu0 %875
      %v877 = vrcp.pop %v876
      %v878 = vmul.f32 %v873, %v877
      %v879 = vpack.c.bf16 %v878, %v878
      %880 = vrot.lane.b32.xlu0 %v220, 44
      %v881 = vpop.permute.xlu0 %880
      %v883 = vsel %vm271, %v879, 0
      %v886 = vsel %vm289, %v881, 0
      %888 = vmatprep.subr.bf16.mxu0 0
      %889 = vmatpush1.bf16.msra.mxu0 0
      %890 = vmatprep.subr.bf16.mxu0 0
      %891 = vmatpush1.bf16.msra.mxu0 0
      %892 = vmatprep.subr.bf16.mxu0 0
      %893 = vmatpush1.bf16.msra.mxu0 0
      %894 = vmatprep.subr.bf16.mxu0 0
      %895 = vmatpush1.bf16.msra.mxu0 0
      %896 = vmatprep.subr.bf16.mxu0 0
      %897 = vmatpush1.bf16.msra.mxu0 0
      %898 = vmatprep.subr.bf16.mxu0 0
      %899 = vmatpush1.bf16.msra.mxu0 0
      %900 = vmatprep.subr.bf16.mxu0 0
      %901 = vmatpush1.bf16.msra.mxu0 0
      %902 = vmatprep.subr.bf16.mxu0 0
      %903 = vmatpush1.bf16.msra.mxu0 %v886
      %904 = vmatprep.subr.bf16.mxu0 0
      %905 = vmatpush2.bf16.msra.mxu0 0
      %906 = vmatprep.subr.bf16.mxu0 0
      %907 = vmatpush2.bf16.msra.mxu0 0
      %908 = vmatprep.subr.bf16.mxu0 0
      %909 = vmatpush2.bf16.msra.mxu0 0
      %910 = vmatprep.subr.bf16.mxu0 0
      %911 = vmatpush2.bf16.msra.mxu0 0
      %912 = vmatprep.subr.bf16.mxu0 0
      %913 = vmatpush2.bf16.msra.mxu0 0
      %914 = vmatprep.subr.bf16.mxu0 0
      %915 = vmatpush2.bf16.msra.mxu0 0
      %916 = vmatprep.subr.bf16.mxu0 0
      %917 = vmatpush2.bf16.msra.mxu0 0
      %918 = vmatprep.subr.bf16.mxu0 0
      %919 = vmatpush2.bf16.msra.mxu0 0
      %920 = vmatprep.mubr.bf16.mxu0 0
      %921 = vmatmul.mubr.bf16.gmra.mxu0 %v883
      %v922 = vpop.f32.mrf.mxu0
      %v923 = vadd.f32 0.0, %v922
      %v924 = vpop.f32.mrf.mxu0
      %v925 = vpop.f32.mrf.mxu0
      %v926 = vpop.f32.mrf.mxu0
      %927 = vdwg.mxu0
      %v928 = vpack.c.bf16 %v923, %v923
      %v930 = vunpack.c.l.b16 %v928
      %v931 = vpack.c.b16 %v930, %v930
      %932 = vrot.lane.b32.xlu0 %v931, 20
      %v933 = vpop.permute.xlu0 %932
      %vm935 = vcmask 191648
      %936 = vst.msk [vmem:[%s196] sm:$0xf] %vm935, %v933
      %937 = vrot.lane.b32.xlu0 %v217, 104
      %v938 = vpop.permute.xlu0 %937
      %939 = vrot.lane.b32.xlu0 %v220, 72
      %v940 = vpop.permute.xlu0 %939
      %v942 = vsel %vm223, %v938, 0
      %v945 = vsel %vm223, %v940, 0
      %947 = vmatprep.subr.bf16.mxu0 0
      %948 = vmatpush1.bf16.xpose.msra.mxu0 0
      %949 = vmatprep.subr.bf16.mxu0 0
      %950 = vmatpush1.bf16.xpose.msra.mxu0 0
      %951 = vmatprep.subr.bf16.mxu0 0
      %952 = vmatpush1.bf16.xpose.msra.mxu0 0
      %953 = vmatprep.subr.bf16.mxu0 0
      %954 = vmatpush1.bf16.xpose.msra.mxu0 0
      %955 = vmatprep.subr.bf16.mxu0 0
      %956 = vmatpush1.bf16.xpose.msra.mxu0 0
      %957 = vmatprep.subr.bf16.mxu0 0
      %958 = vmatpush1.bf16.xpose.msra.mxu0 0
      %959 = vmatprep.subr.bf16.mxu0 0
      %960 = vmatpush1.bf16.xpose.msra.mxu0 0
      %961 = vmatprep.subr.bf16.mxu0 0
      %962 = vmatpush1.bf16.xpose.msra.mxu0 %v945
      %963 = vmatprep.subr.bf16.mxu0 0
      %964 = vmatpush2.bf16.xpose.msra.mxu0 0
      %965 = vmatprep.subr.bf16.mxu0 0
      %966 = vmatpush2.bf16.xpose.msra.mxu0 0
      %967 = vmatprep.subr.bf16.mxu0 0
      %968 = vmatpush2.bf16.xpose.msra.mxu0 0
      %969 = vmatprep.subr.bf16.mxu0 0
      %970 = vmatpush2.bf16.xpose.msra.mxu0 0
      %971 = vmatprep.subr.bf16.mxu0 0
      %972 = vmatpush2.bf16.xpose.msra.mxu0 0
      %973 = vmatprep.subr.bf16.mxu0 0
      %974 = vmatpush2.bf16.xpose.msra.mxu0 0
      %975 = vmatprep.subr.bf16.mxu0 0
      %976 = vmatpush2.bf16.xpose.msra.mxu0 0
      %977 = vmatprep.subr.bf16.mxu0 0
      %978 = vmatpush2.bf16.xpose.msra.mxu0 0
      %979 = vmatprep.mubr.bf16.mxu0 0
      %980 = vmatmul.mubr.bf16.gmra.mxu0 %v942
      %v981 = vpop.f32.mrf.mxu0
      %v982 = vadd.f32 0.0, %v981
      %v983 = vpop.f32.mrf.mxu0
      %v984 = vpop.f32.mrf.mxu0
      %v985 = vpop.f32.mrf.mxu0
      %986 = vdwg.mxu0
      %v987 = vsel %vm214, %v982, -3.4028235e+38
      %v988 = vsel %vm271, %v987, -inf
      %989 = vmax.xlane.f32.xlu0 %v988
      %v990 = vpop.xlane.xlu0 %989
      %v991 = vsub.f32 %v987, %v990
      %v992 = vmul.f32 %v991, 1.442695
      %v993 = vpow.pop %v992
      %v994 = vsel %vm271, %v993, 0.0
      %995 = vadd.xlane.f32.xlu0 %v994
      %v996 = vpop.xlane.xlu0 %995
      %v997 = vrcp.pop %v996
      %v998 = vmul.f32 %v993, %v997
      %v999 = vpack.c.bf16 %v998, %v998
      %1000 = vrot.lane.b32.xlu0 %v220, 40
      %v1001 = vpop.permute.xlu0 %1000
      %v1003 = vsel %vm271, %v999, 0
      %v1006 = vsel %vm289, %v1001, 0
      %1008 = vmatprep.subr.bf16.mxu0 0
      %1009 = vmatpush1.bf16.msra.mxu0 0
      %1010 = vmatprep.subr.bf16.mxu0 0
      %1011 = vmatpush1.bf16.msra.mxu0 0
      %1012 = vmatprep.subr.bf16.mxu0 0
      %1013 = vmatpush1.bf16.msra.mxu0 0
      %1014 = vmatprep.subr.bf16.mxu0 0
      %1015 = vmatpush1.bf16.msra.mxu0 0
      %1016 = vmatprep.subr.bf16.mxu0 0
      %1017 = vmatpush1.bf16.msra.mxu0 0
      %1018 = vmatprep.subr.bf16.mxu0 0
      %1019 = vmatpush1.bf16.msra.mxu0 0
      %1020 = vmatprep.subr.bf16.mxu0 0
      %1021 = vmatpush1.bf16.msra.mxu0 0
      %1022 = vmatprep.subr.bf16.mxu0 0
      %1023 = vmatpush1.bf16.msra.mxu0 %v1006
      %1024 = vmatprep.subr.bf16.mxu0 0
      %1025 = vmatpush2.bf16.msra.mxu0 0
      %1026 = vmatprep.subr.bf16.mxu0 0
      %1027 = vmatpush2.bf16.msra.mxu0 0
      %1028 = vmatprep.subr.bf16.mxu0 0
      %1029 = vmatpush2.bf16.msra.mxu0 0
      %1030 = vmatprep.subr.bf16.mxu0 0
      %1031 = vmatpush2.bf16.msra.mxu0 0
      %1032 = vmatprep.subr.bf16.mxu0 0
      %1033 = vmatpush2.bf16.msra.mxu0 0
      %1034 = vmatprep.subr.bf16.mxu0 0
      %1035 = vmatpush2.bf16.msra.mxu0 0
      %1036 = vmatprep.subr.bf16.mxu0 0
      %1037 = vmatpush2.bf16.msra.mxu0 0
      %1038 = vmatprep.subr.bf16.mxu0 0
      %1039 = vmatpush2.bf16.msra.mxu0 0
      %1040 = vmatprep.mubr.bf16.mxu0 0
      %1041 = vmatmul.mubr.bf16.gmra.mxu0 %v1003
      %v1042 = vpop.f32.mrf.mxu0
      %v1043 = vadd.f32 0.0, %v1042
      %v1044 = vpop.f32.mrf.mxu0
      %v1045 = vpop.f32.mrf.mxu0
      %v1046 = vpop.f32.mrf.mxu0
      %1047 = vdwg.mxu0
      %v1048 = vpack.c.bf16 %v1043, %v1043
      %v1050 = vunpack.c.l.b16 %v1048
      %v1051 = vpack.c.b16 %v1050, %v1050
      %1052 = vrot.lane.b32.xlu0 %v1051, 24
      %v1053 = vpop.permute.xlu0 %1052
      %vm1055 = vcmask 224448
      %1056 = vst.msk [vmem:[%s196] sm:$0xf] %vm1055, %v1053
      %1057 = vrot.lane.b32.xlu0 %v217, 100
      %v1058 = vpop.permute.xlu0 %1057
      %1059 = vrot.lane.b32.xlu0 %v220, 68
      %v1060 = vpop.permute.xlu0 %1059
      %v1062 = vsel %vm223, %v1058, 0
      %v1065 = vsel %vm223, %v1060, 0
      %1067 = vmatprep.subr.bf16.mxu0 0
      %1068 = vmatpush1.bf16.xpose.msra.mxu0 0
      %1069 = vmatprep.subr.bf16.mxu0 0
      %1070 = vmatpush1.bf16.xpose.msra.mxu0 0
      %1071 = vmatprep.subr.bf16.mxu0 0
      %1072 = vmatpush1.bf16.xpose.msra.mxu0 0
      %1073 = vmatprep.subr.bf16.mxu0 0
      %1074 = vmatpush1.bf16.xpose.msra.mxu0 0
      %1075 = vmatprep.subr.bf16.mxu0 0
      %1076 = vmatpush1.bf16.xpose.msra.mxu0 0
      %1077 = vmatprep.subr.bf16.mxu0 0
      %1078 = vmatpush1.bf16.xpose.msra.mxu0 0
      %1079 = vmatprep.subr.bf16.mxu0 0
      %1080 = vmatpush1.bf16.xpose.msra.mxu0 0
      %1081 = vmatprep.subr.bf16.mxu0 0
      %1082 = vmatpush1.bf16.xpose.msra.mxu0 %v1065
      %1083 = vmatprep.subr.bf16.mxu0 0
      %1084 = vmatpush2.bf16.xpose.msra.mxu0 0
      %1085 = vmatprep.subr.bf16.mxu0 0
      %1086 = vmatpush2.bf16.xpose.msra.mxu0 0
      %1087 = vmatprep.subr.bf16.mxu0 0
      %1088 = vmatpush2.bf16.xpose.msra.mxu0 0
      %1089 = vmatprep.subr.bf16.mxu0 0
      %1090 = vmatpush2.bf16.xpose.msra.mxu0 0
      %1091 = vmatprep.subr.bf16.mxu0 0
      %1092 = vmatpush2.bf16.xpose.msra.mxu0 0
      %1093 = vmatprep.subr.bf16.mxu0 0
      %1094 = vmatpush2.bf16.xpose.msra.mxu0 0
      %1095 = vmatprep.subr.bf16.mxu0 0
      %1096 = vmatpush2.bf16.xpose.msra.mxu0 0
      %1097 = vmatprep.subr.bf16.mxu0 0
      %1098 = vmatpush2.bf16.xpose.msra.mxu0 0
      %1099 = vmatprep.mubr.bf16.mxu0 0
      %1100 = vmatmul.mubr.bf16.gmra.mxu0 %v1062
      %v1101 = vpop.f32.mrf.mxu0
      %v1102 = vadd.f32 0.0, %v1101
      %v1103 = vpop.f32.mrf.mxu0
      %v1104 = vpop.f32.mrf.mxu0
      %v1105 = vpop.f32.mrf.mxu0
      %1106 = vdwg.mxu0
      %v1107 = vsel %vm214, %v1102, -3.4028235e+38
      %v1108 = vsel %vm271, %v1107, -inf
      %1109 = vmax.xlane.f32.xlu0 %v1108
      %v1110 = vpop.xlane.xlu0 %1109
      %v1111 = vsub.f32 %v1107, %v1110
      %v1112 = vmul.f32 %v1111, 1.442695
      %v1113 = vpow.pop %v1112
      %v1114 = vsel %vm271, %v1113, 0.0
      %1115 = vadd.xlane.f32.xlu0 %v1114
      %v1116 = vpop.xlane.xlu0 %1115
      %v1117 = vrcp.pop %v1116
      %v1118 = vmul.f32 %v1113, %v1117
      %v1119 = vpack.c.bf16 %v1118, %v1118
      %1120 = vrot.lane.b32.xlu0 %v220, 36
      %v1121 = vpop.permute.xlu0 %1120
      %v1123 = vsel %vm271, %v1119, 0
      %v1126 = vsel %vm289, %v1121, 0
      %1128 = vmatprep.subr.bf16.mxu0 0
      %1129 = vmatpush1.bf16.msra.mxu0 0
      %1130 = vmatprep.subr.bf16.mxu0 0
      %1131 = vmatpush1.bf16.msra.mxu0 0
      %1132 = vmatprep.subr.bf16.mxu0 0
      %1133 = vmatpush1.bf16.msra.mxu0 0
      %1134 = vmatprep.subr.bf16.mxu0 0
      %1135 = vmatpush1.bf16.msra.mxu0 0
      %1136 = vmatprep.subr.bf16.mxu0 0
      %1137 = vmatpush1.bf16.msra.mxu0 0
      %1138 = vmatprep.subr.bf16.mxu0 0
      %1139 = vmatpush1.bf16.msra.mxu0 0
      %1140 = vmatprep.subr.bf16.mxu0 0
      %1141 = vmatpush1.bf16.msra.mxu0 0
      %1142 = vmatprep.subr.bf16.mxu0 0
      %1143 = vmatpush1.bf16.msra.mxu0 %v1126
      %1144 = vmatprep.subr.bf16.mxu0 0
      %1145 = vmatpush2.bf16.msra.mxu0 0
      %1146 = vmatprep.subr.bf16.mxu0 0
      %1147 = vmatpush2.bf16.msra.mxu0 0
      %1148 = vmatprep.subr.bf16.mxu0 0
      %1149 = vmatpush2.bf16.msra.mxu0 0
      %1150 = vmatprep.subr.bf16.mxu0 0
      %1151 = vmatpush2.bf16.msra.mxu0 0
      %1152 = vmatprep.subr.bf16.mxu0 0
      %1153 = vmatpush2.bf16.msra.mxu0 0
      %1154 = vmatprep.subr.bf16.mxu0 0
      %1155 = vmatpush2.bf16.msra.mxu0 0
      %1156 = vmatprep.subr.bf16.mxu0 0
      %1157 = vmatpush2.bf16.msra.mxu0 0
      %1158 = vmatprep.subr.bf16.mxu0 0
      %1159 = vmatpush2.bf16.msra.mxu0 0
      %1160 = vmatprep.mubr.bf16.mxu0 0
      %1161 = vmatmul.mubr.bf16.gmra.mxu0 %v1123
      %v1162 = vpop.f32.mrf.mxu0
      %v1163 = vadd.f32 0.0, %v1162
      %v1164 = vpop.f32.mrf.mxu0
      %v1165 = vpop.f32.mrf.mxu0
      %v1166 = vpop.f32.mrf.mxu0
      %1167 = vdwg.mxu0
      %v1168 = vpack.c.bf16 %v1163, %v1163
      %v1170 = vunpack.c.l.b16 %v1168
      %v1171 = vpack.c.b16 %v1170, %v1170
      %1172 = vrot.lane.b32.xlu0 %v1171, 28
      %v1173 = vpop.permute.xlu0 %1172
      %vm1175 = vcmask 257248
      %1176 = vst.msk [vmem:[%s196] sm:$0xf] %vm1175, %v1173
      %p1177 = scmp.lt.s32.totalorder %s14, 1
      %s1178 = scalar_select %p1177, %s14, 1
      %s1179 = smul.addr %s1178, 4
      %s1180 = scalar_lea.vmem %s3, %s1179
      // Predicated region
      $region33: #{masked_attention_forward.4} parent=31 // pred_check
        %p1181 = pneg %p110
      $region34: #{masked_attention_forward.4} parent=31 // pred_check_branch
        %1183 = sbr.rel (%p1181) target = $region36
      $region35: #{masked_attention_forward.4} parent=31 // pred_region
        _
      $region36: #{masked_attention_forward.4} parent=31 // pred_fallthru
        _
    $region32: #{masked_attention_forward.4} parent=5 // pred_fallthru
      _
    %p1184 = scmp.le.s32.totalorder 2, %s9
    // Predicated region
    $region37: #{masked_attention_forward.4} parent=5 // pred_check
      %p1185 = pneg %p1184
    $region38: #{masked_attention_forward.4} parent=5 // pred_check_branch
      %1187 = sbr.rel (%p1185) target = $region40
    $region39: #{masked_attention_forward.4} parent=5 // pred_region
      %s1188 = ssub.s32 %s9, 2
      // Predicated region
      $region41: #{masked_attention_forward.4} parent=39 // pred_check
        %p1189 = pneg %p116
      $region42: #{masked_attention_forward.4} parent=39 // pred_check_branch
        %1191 = sbr.rel (%p1189) target = $region44
      $region43: #{masked_attention_forward.4} parent=39 // pred_region
        %p1192 = scmp.lt.s32.totalorder %s15, 1
        %s1193 = scalar_select %p1192, %s15, 1
        %s1194 = smul.addr %s1193, 4
        %s1195 = scalar_lea.vmem %s3, %s1194
      $region44: #{masked_attention_forward.4} parent=39 // pred_fallthru
        _
    $region40: #{masked_attention_forward.4} parent=5 // pred_fallthru
      _
  $region6: #{masked_attention_forward.4} parent=0 // loop_footer
    %s13 = sadd.s32 1, %s9
  $region7: #{masked_attention_forward.4} parent=0 // loop_footer_branch
    %8 = sbr.rel target = $region3
  $region8: #{masked_attention_forward.4} parent=0 // loop_exit
    _

</llo_original>
